<compile_context>
chip_gen: v5e
topology: v5e:2x2
jax: 0.10.0
libtpu: 0.0.40
codegen_flags: <defaults>
</compile_context>

<pallas_src>
import functools

import jax
import jax.numpy as jnp
from jax.experimental import pallas as pl
from jax.experimental.pallas import tpu as pltpu


# ----------------------------------------------------------------------------
# Pass 1: normalize x1 (scaled by 1/beta) and x2 to bf16, compute diag term.
# ----------------------------------------------------------------------------
def _prep_kernel(x1_ref, x2_ref, x1n_ref, x2n_ref, diag_ref, *, inv_beta):
    # F.normalize clamp: x / max(||x||, 1e-12) == x * rsqrt(max(sumsq, 1e-24))
    eps_sq = 1e-24
    x1 = x1_ref[...].astype(jnp.float32)
    x2 = x2_ref[...].astype(jnp.float32)
    inv1 = jax.lax.rsqrt(
        jnp.maximum(jnp.sum(x1 * x1, axis=-1, keepdims=True), eps_sq))
    inv2 = jax.lax.rsqrt(
        jnp.maximum(jnp.sum(x2 * x2, axis=-1, keepdims=True), eps_sq))
    # Fold 1/beta into x1n so the main kernel needs no extra BxB scaling pass.
    x1n = (x1 * (inv1 * inv_beta)).astype(jnp.bfloat16)
    x2n = (x2 * inv2).astype(jnp.bfloat16)
    x1n_ref[...] = x1n
    x2n_ref[...] = x2n
    # Diagonal (label) term from the same bf16 values the MXU will see,
    # accumulated in f32.  Written lane-dense for an unmasked vst.
    d = jnp.sum(x1n.astype(jnp.float32) * x2n.astype(jnp.float32),
                axis=-1, keepdims=True)
    diag_ref[...] = jnp.broadcast_to(d, diag_ref.shape)


# ----------------------------------------------------------------------------
# Pass 2: tiled online-softmax logsumexp; writes per-row (lse - diag).
# ----------------------------------------------------------------------------
def _lse_kernel(x1n_ref, x2n_ref, diag_ref, out_ref, m_sc, l_sc):
    j = pl.program_id(1)  # column-tile index (arbitrary, innermost)

    @pl.when(j == 0)
    def _init():
        m_sc[...] = jnp.full(m_sc.shape, -jnp.inf, dtype=jnp.float32)
        l_sc[...] = jnp.zeros(l_sc.shape, dtype=jnp.float32)

    # logits tile (T_r, T_c): contract the last dim of both bf16 operands ->
    # feeds the MXU directly (no XLU transpose), f32 accumulation.
    s = jax.lax.dot_general(
        x1n_ref[...], x2n_ref[...], (((1,), (1,)), ((), ())),
        preferred_element_type=jnp.float32)

    # Online softmax: running max and running sum of exp per row.
    m_prev = m_sc[...]
    m_new = jnp.maximum(m_prev, jnp.max(s, axis=-1, keepdims=True))
    alpha = jnp.exp(m_prev - m_new)
    p_sum = jnp.sum(jnp.exp(s - m_new), axis=-1, keepdims=True)
    l_sc[...] = alpha * l_sc[...] + p_sum
    m_sc[...] = m_new

    # Finalize: per-row (logsumexp - diag), lane-dense (unmasked vst).
    @pl.when(j == pl.num_programs(1) - 1)
    def _finalize():
        lse = m_sc[...] + jnp.log(l_sc[...])          # (T_r, 1)
        out_ref[...] = lse - diag_ref[...]            # broadcast -> (T_r, 128)


# ----------------------------------------------------------------------------
# Tiling / VMEM helpers.
# ----------------------------------------------------------------------------
def _vmem_limit_bytes():
    """~75% of physical VMEM: ~96 MiB on v5e/v6e, ~48 MiB on v7x."""
    cap = 64 * 1024 * 1024  # conservative default (v7x-sized)
    try:
        cap = int(pltpu.get_tpu_info().vmem_capacity_bytes)
    except Exception:
        pass
    return (cap // 4) * 3


def _largest_div_tile(n, target):
    """Largest t <= target with t % 16 == 0 and n % t == 0, else None."""
    t = min(int(target), n)
    t -= t % 16
    while t >= 16:
        if n % t == 0:
            return t
        t -= 16
    return None


def _pick_col_tile(B, block_cols):
    t = _largest_div_tile(B, block_cols)
    return t if t is not None else B  # full-dim block is always legal


def _pick_row_tile(B, D, t_c, vmem_limit, block_rows=None):
    if block_rows is None:
        # Per-row VMEM cost: double-buffered bf16 x1n block (4D) + f32
        # logits-sized temporaries (~16*T_c) + lane-padded diag/out/scratch.
        per_row = 4 * D + 16 * t_c + 4096
        fixed = 4 * t_c * D + (12 << 20)  # x2n double-buffer + compiler slack
        target = max((vmem_limit - fixed) // per_row, 16)
        if B // 2 >= 16:
            # >=2 row tiles so the "parallel" axis actually shards across the
            # two v7x TensorCores (near-free on single-core v5e/v6e).
            target = min(target, B // 2)
    else:
        target = block_rows
    t = _largest_div_tile(B, target)
    return t if t is not None else B


def _pick_prep_tile(B, D, vmem_limit):
    per_row = 48 * D + 2048
    target = max((vmem_limit - (8 << 20)) // per_row, 16)
    t = _largest_div_tile(B, min(target, 1024))
    return t if t is not None else B


def _check_vmem(t_r, t_c, D, vmem_limit):
    est = (2 * t_r * D * 2          # x1n bf16 double-buffer
           + 2 * t_c * D * 2        # x2n bf16 double-buffer
           + 2 * 2 * t_r * 128 * 4  # diag + out f32 double-buffers
           + 2 * t_r * 128 * 4      # m/l scratch (lane-padded)
           + 3 * t_r * t_c * 4)     # logits-sized f32 temporaries
    if est > vmem_limit:
        raise ValueError(
            "contrastive_loss tiling (T_r=%d, T_c=%d, D=%d) needs ~%d MiB VMEM"
            " > %d MiB limit; pad the batch to a multiple of 16 or pass "
            "smaller block_rows/block_cols." %
            (t_r, t_c, D, est >> 20, vmem_limit >> 20))


# ----------------------------------------------------------------------------
# Public wrapper.
# ----------------------------------------------------------------------------
def contrastive_loss(x1, x2, beta=0.08, *, block_cols=256, block_rows=None):
    """Pallas TPU implementation of ContrastiveLoss.forward(x1, x2)."""
    assert x1.shape == x2.shape and x1.ndim == 2
    B, D = x1.shape
    vmem_limit = _vmem_limit_bytes()

    # ---- Pass 1: one-shot bf16 pre-normalization + diagonal term. ----------
    t_p = _pick_prep_tile(B, D, vmem_limit)
    x1n, x2n, diag = pl.pallas_call(
        functools.partial(_prep_kernel, inv_beta=1.0 / float(beta)),
        out_shape=(jax.ShapeDtypeStruct((B, D), jnp.bfloat16),
                   jax.ShapeDtypeStruct((B, D), jnp.bfloat16),
                   jax.ShapeDtypeStruct((B, 128), jnp.float32)),
        grid_spec=pltpu.PrefetchScalarGridSpec(
            num_scalar_prefetch=0,
            grid=(B // t_p,),
            in_specs=[pl.BlockSpec((t_p, D), lambda i: (i, 0)),
                      pl.BlockSpec((t_p, D), lambda i: (i, 0))],
            out_specs=(pl.BlockSpec((t_p, D), lambda i: (i, 0)),
                       pl.BlockSpec((t_p, D), lambda i: (i, 0)),
                       pl.BlockSpec((t_p, 128), lambda i: (i, 0))),
        ),
        compiler_params=pltpu.CompilerParams(
            dimension_semantics=("parallel",),
            vmem_limit_bytes=vmem_limit),
    )(x1, x2)

    # ---- Pass 2: asymmetric-tiled online-softmax logsumexp. ----------------
    t_c = _pick_col_tile(B, block_cols)
    t_r = _pick_row_tile(B, D, t_c, vmem_limit, block_rows)
    _check_vmem(t_r, t_c, D, vmem_limit)

    per_row = pl.pallas_call(
        _lse_kernel,
        out_shape=jax.ShapeDtypeStruct((B, 128), jnp.float32),
        grid_spec=pltpu.PrefetchScalarGridSpec(
            num_scalar_prefetch=0,
            grid=(B // t_r, B // t_c),
            in_specs=[
                # Resident bf16 x1n row tile (constant across the column axis).
                pl.BlockSpec((t_r, D), lambda i, j: (i, 0)),
                # Streamed bf16 x2n column tile, double-buffered by BlockSpec.
                pl.BlockSpec((t_c, D), lambda i, j: (j, 0)),
                # Resident per-row diagonal term (lane-dense).
                pl.BlockSpec((t_r, 128), lambda i, j: (i, 0)),
            ],
            out_specs=pl.BlockSpec((t_r, 128), lambda i, j: (i, 0)),
            scratch_shapes=[
                pltpu.VMEM((t_r, 1), jnp.float32),   # running max  m_i
                pltpu.VMEM((t_r, 1), jnp.float32),   # running sum  l_i
            ],
        ),
        compiler_params=pltpu.CompilerParams(
            # Row axis independent -> megacore-shardable; column axis carries
            # the online-softmax accumulation.
            dimension_semantics=("parallel", "arbitrary"),
            vmem_limit_bytes=vmem_limit),
    )(x1n, x2n, diag)

    # Rows are lane-constant: mean over the whole slab equals the per-row mean
    # and avoids a strided lane-0 gather in XLA.
    return jnp.mean(per_row)


class ContrastiveLoss:
    """Mirror of the PyTorch module interface."""

    def __init__(self, **kwargs):
        self.beta = kwargs.get("beta", 0.08)

    def __call__(self, x1, x2):
        return contrastive_loss(x1, x2, self.beta)


def _reference_contrastive_loss(x1, x2, beta=0.08):
    """Pure-JAX reference mirroring the PyTorch semantics (f32 throughout)."""
    eps = 1e-12
    x1n = x1 / jnp.maximum(jnp.linalg.norm(x1, axis=-1, keepdims=True), eps)
    x2n = x2 / jnp.maximum(jnp.linalg.norm(x2, axis=-1, keepdims=True), eps)
    logits = (x1n @ x2n.T) / beta
    logp = jax.nn.log_softmax(logits, axis=-1)
    n = x1.shape[0]
    return -jnp.mean(logp[jnp.arange(n), jnp.arange(n)])


if __name__ == "__main__":
    key = jax.random.PRNGKey(0)
    k1, k2, k3, k4 = jax.random.split(key, 4)
    beta = 0.08

    # Asymmetric tiles + multi-step online softmax + >=2 parallel row tiles:
    # B=256, D=128, block_cols=64 -> T_r=128, T_c=64, grid (2, 4).
    B, D = 256, 128
    x1 = jax.random.normal(k1, (B, D), dtype=jnp.float32)
    x2 = jax.random.normal(k2, (B, D), dtype=jnp.float32)
    loss = jax.block_until_ready(contrastive_loss(x1, x2, beta, block_cols=64))
    ref = _reference_contrastive_loss(x1, x2, beta)
    # bf16 MXU inputs introduce ~1e-3 relative drift on the loss vs f32 ref.
    assert jnp.allclose(loss, ref, rtol=2e-2, atol=2e-2), (loss, ref)

    # Default tiling path through the module-style wrapper (grid (2, 1)).
    loss_d = jax.block_until_ready(ContrastiveLoss(beta=beta)(x1, x2))
    assert jnp.allclose(loss_d, ref, rtol=2e-2, atol=2e-2), (loss_d, ref)

    # Tiny single-tile fallback path (whole-array blocks, grid (1, 1)).
    xs1 = jax.random.normal(k3, (8, 32), dtype=jnp.float32)
    xs2 = jax.random.normal(k4, (8, 32), dtype=jnp.float32)
    loss_s = jax.block_until_ready(contrastive_loss(xs1, xs2, beta))
    ref_s = _reference_contrastive_loss(xs1, xs2, beta)
    assert jnp.allclose(loss_s, ref_s, rtol=2e-2, atol=2e-2), (loss_s, ref_s)

    print("KERNEL_OK")
</pallas_src>

<mosaic_0001>
module attributes {stable_mosaic.version = 11 : i64} {
  func.func @_prep_kernel(%arg0: i32, %arg1: memref<256x128xf32, #tpu.memory_space<vmem>>, %arg2: memref<256x128xf32, #tpu.memory_space<vmem>>, %arg3: memref<256x128xbf16, #tpu.memory_space<vmem>>, %arg4: memref<256x128xbf16, #tpu.memory_space<vmem>>, %arg5: memref<256x128xf32, #tpu.memory_space<vmem>>) attributes {dimension_semantics = [#tpu.dimension_semantics<parallel>], iteration_bounds = array<i64: 1>, scalar_prefetch = 0 : i64, scratch_operands = 0 : i64, tpu.core_type = #tpu.core_type<tc>, window_params = [{transform_indices = @transform_0, window_bounds = array<i64: 256, 128>}, {transform_indices = @transform_1, window_bounds = array<i64: 256, 128>}, {transform_indices = @transform_2, window_bounds = array<i64: 256, 128>}, {transform_indices = @transform_3, window_bounds = array<i64: 256, 128>}, {transform_indices = @transform_4, window_bounds = array<i64: 256, 128>}]} {
    %c0 = arith.constant 0 : index
    %c0_0 = arith.constant 0 : index
    %0 = vector.load %arg1[%c0, %c0_0] : memref<256x128xf32, #tpu.memory_space<vmem>>, vector<256x128xf32>
    %c0_1 = arith.constant 0 : index
    %c0_2 = arith.constant 0 : index
    %1 = vector.load %arg2[%c0_1, %c0_2] : memref<256x128xf32, #tpu.memory_space<vmem>>, vector<256x128xf32>
    %2 = arith.mulf %0, %0 : vector<256x128xf32>
    %cst = arith.constant dense<0.000000e+00> : vector<256xf32>
    %3 = vector.multi_reduction <add>, %2, %cst [1] : vector<256x128xf32> to vector<256xf32>
    %4 = vector.shape_cast %3 : vector<256xf32> to vector<256x1xf32>
    %cst_3 = arith.constant 1.000000e-24 : f32
    %5 = vector.broadcast %cst_3 : f32 to vector<256x1xf32>
    %6 = arith.maximumf %4, %5 : vector<256x1xf32>
    %7 = math.rsqrt %6 : vector<256x1xf32>
    %8 = arith.mulf %1, %1 : vector<256x128xf32>
    %cst_4 = arith.constant dense<0.000000e+00> : vector<256xf32>
    %9 = vector.multi_reduction <add>, %8, %cst_4 [1] : vector<256x128xf32> to vector<256xf32>
    %10 = vector.shape_cast %9 : vector<256xf32> to vector<256x1xf32>
    %cst_5 = arith.constant 1.000000e-24 : f32
    %11 = vector.broadcast %cst_5 : f32 to vector<256x1xf32>
    %12 = arith.maximumf %10, %11 : vector<256x1xf32>
    %13 = math.rsqrt %12 : vector<256x1xf32>
    %cst_6 = arith.constant 1.250000e+01 : f32
    %14 = vector.broadcast %cst_6 : f32 to vector<256x1xf32>
    %15 = arith.mulf %7, %14 : vector<256x1xf32>
    %16 = vector.broadcast %15 : vector<256x1xf32> to vector<256x128xf32>
    %17 = arith.mulf %0, %16 : vector<256x128xf32>
    %18 = arith.truncf %17 : vector<256x128xf32> to vector<256x128xbf16>
    %19 = vector.broadcast %13 : vector<256x1xf32> to vector<256x128xf32>
    %20 = arith.mulf %1, %19 : vector<256x128xf32>
    %21 = arith.truncf %20 : vector<256x128xf32> to vector<256x128xbf16>
    %c0_7 = arith.constant 0 : index
    %c0_8 = arith.constant 0 : index
    %22 = vector.load %arg3[%c0_7, %c0_8] : memref<256x128xbf16, #tpu.memory_space<vmem>>, vector<256x128xbf16>
    tpu.vector_store %arg3[%c0_7, %c0_8], %18 {strides = array<i32>} : memref<256x128xbf16, #tpu.memory_space<vmem>>, vector<256x128xbf16>,
    %c0_9 = arith.constant 0 : index
    %c0_10 = arith.constant 0 : index
    %23 = vector.load %arg4[%c0_9, %c0_10] : memref<256x128xbf16, #tpu.memory_space<vmem>>, vector<256x128xbf16>
    tpu.vector_store %arg4[%c0_9, %c0_10], %21 {strides = array<i32>} : memref<256x128xbf16, #tpu.memory_space<vmem>>, vector<256x128xbf16>,
    %24 = arith.extf %18 : vector<256x128xbf16> to vector<256x128xf32>
    %25 = arith.extf %21 : vector<256x128xbf16> to vector<256x128xf32>
    %26 = arith.mulf %24, %25 : vector<256x128xf32>
    %cst_11 = arith.constant dense<0.000000e+00> : vector<256xf32>
    %27 = vector.multi_reduction <add>, %26, %cst_11 [1] : vector<256x128xf32> to vector<256xf32>
    %28 = vector.shape_cast %27 : vector<256xf32> to vector<256x1xf32>
    %29 = vector.shape_cast %28 : vector<256x1xf32> to vector<256x1xf32>
    %30 = vector.broadcast %29 : vector<256x1xf32> to vector<256x128xf32>
    %c0_12 = arith.constant 0 : index
    %c0_13 = arith.constant 0 : index
    %31 = vector.load %arg5[%c0_12, %c0_13] : memref<256x128xf32, #tpu.memory_space<vmem>>, vector<256x128xf32>
    tpu.vector_store %arg5[%c0_12, %c0_13], %30 {strides = array<i32>} : memref<256x128xf32, #tpu.memory_space<vmem>>, vector<256x128xf32>,
    return
  }
  func.func @transform_0(%arg0: i32) -> (i32, i32) {
    %c0_i32 = arith.constant 0 : i32
    %c0_i32_0 = arith.constant 0 : i32
    return %arg0, %c0_i32 : i32, i32
  }
  func.func @transform_1(%arg0: i32) -> (i32, i32) {
    %c0_i32 = arith.constant 0 : i32
    %c0_i32_0 = arith.constant 0 : i32
    return %arg0, %c0_i32 : i32, i32
  }
  func.func @transform_2(%arg0: i32) -> (i32, i32) {
    %c0_i32 = arith.constant 0 : i32
    %c0_i32_0 = arith.constant 0 : i32
    return %arg0, %c0_i32 : i32, i32
  }
  func.func @transform_3(%arg0: i32) -> (i32, i32) {
    %c0_i32 = arith.constant 0 : i32
    %c0_i32_0 = arith.constant 0 : i32
    return %arg0, %c0_i32 : i32, i32
  }
  func.func @transform_4(%arg0: i32) -> (i32, i32) {
    %c0_i32 = arith.constant 0 : i32
    %c0_i32_0 = arith.constant 0 : i32
    return %arg0, %c0_i32 : i32, i32
  }
}

</mosaic_0001>

<llo_original>
// kernel: tpu_custom_call.1
$region0: #{tpu_custom_call.1}
  #allocation0 [shape = 'u32[]', space=smem, size = 0x4, offset = 0x4, fixed_abs, tag = 'smem constant byte address 0x4 - core index']
  #allocation1 [shape = 'u32[72,128]{1,0:T(1,128)}', space=vmem, size = 0x9000, scoped, tag = 'internal scratch']
  %s0 = inlined_call_operand.hbm [shape: f32[256,128], index: 0, kind: input, shape index: {}]
  %s1 = inlined_call_operand.hbm [shape: f32[256,128], index: 1, kind: input, shape index: {}]
  %s2 = inlined_call_operand.hbm [shape: bf16[256,128], index: 2, kind: output, shape index: {0}]
  %s3 = inlined_call_operand.hbm [shape: bf16[256,128], index: 3, kind: output, shape index: {1}]
  %s4 = inlined_call_operand.hbm [shape: f32[256,128], index: 4, kind: output, shape index: {2}]
  %5 = xla_tuple %s2, %s3, %s4
  %s6 = sld [smem:[#allocation0]]
  $region42: #{tpu_custom_call.1} parent=0
    _
  %s8 = ssub.s32 1, %s6
  %s9 = scalar_select 0, %s8, %s6
  $region1: #{tpu_custom_call.1} parent=0
    #allocation2 [shape = 'u8[131072]{0}', space=vmem, size = 0x20000, scoped, tag = 'input window, operand 0, single buffered']
    #allocation3 [shape = 's32[1]{0}', space=sflag, size = 0x4, scoped, tag = 'scoped memory for tpu_custom_call.1']
    #allocation4 [shape = 's32[1]{0}', space=sflag, size = 0x4, scoped, tag = 'scoped memory for tpu_custom_call.1']
    #allocation5 [shape = 'u8[131072]{0}', space=vmem, size = 0x20000, scoped, tag = 'input window, operand 1, single buffered']
    #allocation6 [shape = 's32[1]{0}', space=sflag, size = 0x4, scoped, tag = 'scoped memory for tpu_custom_call.1']
    #allocation7 [shape = 'u8[65536]{0}', space=vmem, size = 0x10000, scoped, tag = 'output window, operand 0, single buffered']
    #allocation8 [shape = 'u8[65536]{0}', space=vmem, size = 0x10000, scoped, tag = 'output window, operand 1, single buffered']
    #allocation9 [shape = 's32[1]{0}', space=sflag, size = 0x4, scoped, tag = 'scoped memory for tpu_custom_call.1']
    #allocation10 [shape = 'u8[131072]{0}', space=vmem, size = 0x20000, scoped, tag = 'output window, operand 2, single buffered']
    %10 = vsyncpa [#allocation3], 0
    %11 = vsyncpa [#allocation6], 0
    %12 = vsyncpa [#allocation4], 0
    %13 = vsyncpa [#allocation9], 0
    // Predicated region
    $region2: #{tpu_custom_call.1} parent=1 // pred_check
      _
    $region3: #{tpu_custom_call.1} parent=1 // pred_check_branch
      %15 = sbr.rel (0) target = $region5
    $region4: #{tpu_custom_call.1} parent=1 // pred_region
      %17 = vsyncadd [#allocation3], 0
      %s18 = sshll.u32 %s0, 4
      %s19 = int_to_ptr.hbm [resolvable:$true] %s18
      %s20 = sshll.u32 [#allocation2], 4
      %s21 = int_to_ptr.vmem [resolvable:$true] %s20
      %26 = dma.hbm_to_vmem [thread:$0]  %s19, 4096, %s21, [#allocation3], 128, 128, 8
    $region5: #{tpu_custom_call.1} parent=1 // pred_fallthru
      _
    // Predicated region
    $region6: #{tpu_custom_call.1} parent=1 // pred_check
      _
    $region7: #{tpu_custom_call.1} parent=1 // pred_check_branch
      %28 = sbr.rel (0) target = $region9
    $region8: #{tpu_custom_call.1} parent=1 // pred_region
      %30 = vsyncadd [#allocation6], 0
      %s31 = sshll.u32 %s1, 4
      %s32 = int_to_ptr.hbm [resolvable:$true] %s31
      %s33 = sshll.u32 [#allocation5], 4
      %s34 = int_to_ptr.vmem [resolvable:$true] %s33
      %39 = dma.hbm_to_vmem [thread:$0]  %s32, 4096, %s34, [#allocation6], 128, 128, 8
    $region9: #{tpu_custom_call.1} parent=1 // pred_fallthru
      _
    // Predicated region
    $region10: #{tpu_custom_call.1} parent=1 // pred_check
      _
    $region11: #{tpu_custom_call.1} parent=1 // pred_check_branch
      %41 = sbr.rel (0) target = $region13
    $region12: #{tpu_custom_call.1} parent=1 // pred_region
      %43 = dma.done [#allocation3], 4096
    $region13: #{tpu_custom_call.1} parent=1 // pred_fallthru
      _
    // Predicated region
    $region14: #{tpu_custom_call.1} parent=1 // pred_check
      _
    $region15: #{tpu_custom_call.1} parent=1 // pred_check_branch
      %45 = sbr.rel (0) target = $region17
    $region16: #{tpu_custom_call.1} parent=1 // pred_region
      %47 = dma.done [#allocation6], 4096
    $region17: #{tpu_custom_call.1} parent=1 // pred_fallthru
      _
    %v48 = vld [vmem:[#allocation2] sm:$0xff]
    %v49 = vld [vmem:[#allocation2 + $0x8] sm:$0xff]
    %v50 = vld [vmem:[#allocation2 + $0x10] sm:$0xff]
    %v51 = vld [vmem:[#allocation2 + $0x18] sm:$0xff]
    %v52 = vld [vmem:[#allocation2 + $0x20] sm:$0xff]
    %v53 = vld [vmem:[#allocation2 + $0x28] sm:$0xff]
    %v54 = vld [vmem:[#allocation2 + $0x30] sm:$0xff]
    %v55 = vld [vmem:[#allocation2 + $0x38] sm:$0xff]
    %v56 = vld [vmem:[#allocation2 + $0x40] sm:$0xff]
    %v57 = vld [vmem:[#allocation2 + $0x48] sm:$0xff]
    %v58 = vld [vmem:[#allocation2 + $0x50] sm:$0xff]
    %v59 = vld [vmem:[#allocation2 + $0x58] sm:$0xff]
    %v60 = vld [vmem:[#allocation2 + $0x60] sm:$0xff]
    %v61 = vld [vmem:[#allocation2 + $0x68] sm:$0xff]
    %v62 = vld [vmem:[#allocation2 + $0x70] sm:$0xff]
    %v63 = vld [vmem:[#allocation2 + $0x78] sm:$0xff]
    %v64 = vld [vmem:[#allocation2 + $0x80] sm:$0xff]
    %v65 = vld [vmem:[#allocation2 + $0x88] sm:$0xff]
    %v66 = vld [vmem:[#allocation2 + $0x90] sm:$0xff]
    %v67 = vld [vmem:[#allocation2 + $0x98] sm:$0xff]
    %v68 = vld [vmem:[#allocation2 + $0xa0] sm:$0xff]
    %v69 = vld [vmem:[#allocation2 + $0xa8] sm:$0xff]
    %v70 = vld [vmem:[#allocation2 + $0xb0] sm:$0xff]
    %v71 = vld [vmem:[#allocation2 + $0xb8] sm:$0xff]
    %v72 = vld [vmem:[#allocation2 + $0xc0] sm:$0xff]
    %v73 = vld [vmem:[#allocation2 + $0xc8] sm:$0xff]
    %v74 = vld [vmem:[#allocation2 + $0xd0] sm:$0xff]
    %v75 = vld [vmem:[#allocation2 + $0xd8] sm:$0xff]
    %v76 = vld [vmem:[#allocation2 + $0xe0] sm:$0xff]
    %v77 = vld [vmem:[#allocation2 + $0xe8] sm:$0xff]
    %v78 = vld [vmem:[#allocation2 + $0xf0] sm:$0xff]
    %v79 = vld [vmem:[#allocation2 + $0xf8] sm:$0xff]
    %v80 = vld [vmem:[#allocation5] sm:$0xff]
    %v81 = vld [vmem:[#allocation5 + $0x8] sm:$0xff]
    %v82 = vld [vmem:[#allocation5 + $0x10] sm:$0xff]
    %v83 = vld [vmem:[#allocation5 + $0x18] sm:$0xff]
    %v84 = vld [vmem:[#allocation5 + $0x20] sm:$0xff]
    %v85 = vld [vmem:[#allocation5 + $0x28] sm:$0xff]
    %v86 = vld [vmem:[#allocation5 + $0x30] sm:$0xff]
    %v87 = vld [vmem:[#allocation5 + $0x38] sm:$0xff]
    %v88 = vld [vmem:[#allocation5 + $0x40] sm:$0xff]
    %v89 = vld [vmem:[#allocation5 + $0x48] sm:$0xff]
    %v90 = vld [vmem:[#allocation5 + $0x50] sm:$0xff]
    %v91 = vld [vmem:[#allocation5 + $0x58] sm:$0xff]
    %v92 = vld [vmem:[#allocation5 + $0x60] sm:$0xff]
    %v93 = vld [vmem:[#allocation5 + $0x68] sm:$0xff]
    %v94 = vld [vmem:[#allocation5 + $0x70] sm:$0xff]
    %v95 = vld [vmem:[#allocation5 + $0x78] sm:$0xff]
    %v96 = vld [vmem:[#allocation5 + $0x80] sm:$0xff]
    %v97 = vld [vmem:[#allocation5 + $0x88] sm:$0xff]
    %v98 = vld [vmem:[#allocation5 + $0x90] sm:$0xff]
    %v99 = vld [vmem:[#allocation5 + $0x98] sm:$0xff]
    %v100 = vld [vmem:[#allocation5 + $0xa0] sm:$0xff]
    %v101 = vld [vmem:[#allocation5 + $0xa8] sm:$0xff]
    %v102 = vld [vmem:[#allocation5 + $0xb0] sm:$0xff]
    %v103 = vld [vmem:[#allocation5 + $0xb8] sm:$0xff]
    %v104 = vld [vmem:[#allocation5 + $0xc0] sm:$0xff]
    %v105 = vld [vmem:[#allocation5 + $0xc8] sm:$0xff]
    %v106 = vld [vmem:[#allocation5 + $0xd0] sm:$0xff]
    %v107 = vld [vmem:[#allocation5 + $0xd8] sm:$0xff]
    %v108 = vld [vmem:[#allocation5 + $0xe0] sm:$0xff]
    %v109 = vld [vmem:[#allocation5 + $0xe8] sm:$0xff]
    %v110 = vld [vmem:[#allocation5 + $0xf0] sm:$0xff]
    %v111 = vld [vmem:[#allocation5 + $0xf8] sm:$0xff]
    %v112 = vmul.f32 %v48, %v48
    %v113 = vmul.f32 %v49, %v49
    %v114 = vmul.f32 %v50, %v50
    %v115 = vmul.f32 %v51, %v51
    %v116 = vmul.f32 %v52, %v52
    %v117 = vmul.f32 %v53, %v53
    %v118 = vmul.f32 %v54, %v54
    %v119 = vmul.f32 %v55, %v55
    %v120 = vmul.f32 %v56, %v56
    %v121 = vmul.f32 %v57, %v57
    %v122 = vmul.f32 %v58, %v58
    %v123 = vmul.f32 %v59, %v59
    %v124 = vmul.f32 %v60, %v60
    %v125 = vmul.f32 %v61, %v61
    %v126 = vmul.f32 %v62, %v62
    %v127 = vmul.f32 %v63, %v63
    %v128 = vmul.f32 %v64, %v64
    %v129 = vmul.f32 %v65, %v65
    %v130 = vmul.f32 %v66, %v66
    %v131 = vmul.f32 %v67, %v67
    %v132 = vmul.f32 %v68, %v68
    %v133 = vmul.f32 %v69, %v69
    %v134 = vmul.f32 %v70, %v70
    %v135 = vmul.f32 %v71, %v71
    %v136 = vmul.f32 %v72, %v72
    %v137 = vmul.f32 %v73, %v73
    %v138 = vmul.f32 %v74, %v74
    %v139 = vmul.f32 %v75, %v75
    %v140 = vmul.f32 %v76, %v76
    %v141 = vmul.f32 %v77, %v77
    %v142 = vmul.f32 %v78, %v78
    %v143 = vmul.f32 %v79, %v79
    %144 = vadd.xlane.f32.xlu0 %v112
    %v145 = vpop.xlane.xlu0 %144
    %146 = vadd.xlane.f32.xlu0 %v113
    %v147 = vpop.xlane.xlu0 %146
    %148 = vadd.xlane.f32.xlu0 %v114
    %v149 = vpop.xlane.xlu0 %148
    %150 = vadd.xlane.f32.xlu0 %v115
    %v151 = vpop.xlane.xlu0 %150
    %152 = vadd.xlane.f32.xlu0 %v116
    %v153 = vpop.xlane.xlu0 %152
    %154 = vadd.xlane.f32.xlu0 %v117
    %v155 = vpop.xlane.xlu0 %154
    %156 = vadd.xlane.f32.xlu0 %v118
    %v157 = vpop.xlane.xlu0 %156
    %158 = vadd.xlane.f32.xlu0 %v119
    %v159 = vpop.xlane.xlu0 %158
    %160 = vadd.xlane.f32.xlu0 %v120
    %v161 = vpop.xlane.xlu0 %160
    %162 = vadd.xlane.f32.xlu0 %v121
    %v163 = vpop.xlane.xlu0 %162
    %164 = vadd.xlane.f32.xlu0 %v122
    %v165 = vpop.xlane.xlu0 %164
    %166 = vadd.xlane.f32.xlu0 %v123
    %v167 = vpop.xlane.xlu0 %166
    %168 = vadd.xlane.f32.xlu0 %v124
    %v169 = vpop.xlane.xlu0 %168
    %170 = vadd.xlane.f32.xlu0 %v125
    %v171 = vpop.xlane.xlu0 %170
    %172 = vadd.xlane.f32.xlu0 %v126
    %v173 = vpop.xlane.xlu0 %172
    %174 = vadd.xlane.f32.xlu0 %v127
    %v175 = vpop.xlane.xlu0 %174
    %176 = vadd.xlane.f32.xlu0 %v128
    %v177 = vpop.xlane.xlu0 %176
    %178 = vadd.xlane.f32.xlu0 %v129
    %v179 = vpop.xlane.xlu0 %178
    %180 = vadd.xlane.f32.xlu0 %v130
    %v181 = vpop.xlane.xlu0 %180
    %182 = vadd.xlane.f32.xlu0 %v131
    %v183 = vpop.xlane.xlu0 %182
    %184 = vadd.xlane.f32.xlu0 %v132
    %v185 = vpop.xlane.xlu0 %184
    %186 = vadd.xlane.f32.xlu0 %v133
    %v187 = vpop.xlane.xlu0 %186
    %188 = vadd.xlane.f32.xlu0 %v134
    %v189 = vpop.xlane.xlu0 %188
    %190 = vadd.xlane.f32.xlu0 %v135
    %v191 = vpop.xlane.xlu0 %190
    %192 = vadd.xlane.f32.xlu0 %v136
    %v193 = vpop.xlane.xlu0 %192
    %194 = vadd.xlane.f32.xlu0 %v137
    %v195 = vpop.xlane.xlu0 %194
    %196 = vadd.xlane.f32.xlu0 %v138
    %v197 = vpop.xlane.xlu0 %196
    %198 = vadd.xlane.f32.xlu0 %v139
    %v199 = vpop.xlane.xlu0 %198
    %200 = vadd.xlane.f32.xlu0 %v140
    %v201 = vpop.xlane.xlu0 %200
    %202 = vadd.xlane.f32.xlu0 %v141
    %v203 = vpop.xlane.xlu0 %202
    %204 = vadd.xlane.f32.xlu0 %v142
    %v205 = vpop.xlane.xlu0 %204
    %206 = vadd.xlane.f32.xlu0 %v143
    %v207 = vpop.xlane.xlu0 %206
    %v208 = vmax.f32 %v145, 1e-24
    %v209 = vmax.f32 %v147, 1e-24
    %v210 = vmax.f32 %v149, 1e-24
    %v211 = vmax.f32 %v151, 1e-24
    %v212 = vmax.f32 %v153, 1e-24
    %v213 = vmax.f32 %v155, 1e-24
    %v214 = vmax.f32 %v157, 1e-24
    %v215 = vmax.f32 %v159, 1e-24
    %v216 = vmax.f32 %v161, 1e-24
    %v217 = vmax.f32 %v163, 1e-24
    %v218 = vmax.f32 %v165, 1e-24
    %v219 = vmax.f32 %v167, 1e-24
    %v220 = vmax.f32 %v169, 1e-24
    %v221 = vmax.f32 %v171, 1e-24
    %v222 = vmax.f32 %v173, 1e-24
    %v223 = vmax.f32 %v175, 1e-24
    %v224 = vmax.f32 %v177, 1e-24
    %v225 = vmax.f32 %v179, 1e-24
    %v226 = vmax.f32 %v181, 1e-24
    %v227 = vmax.f32 %v183, 1e-24
    %v228 = vmax.f32 %v185, 1e-24
    %v229 = vmax.f32 %v187, 1e-24
    %v230 = vmax.f32 %v189, 1e-24
    %v231 = vmax.f32 %v191, 1e-24
    %v232 = vmax.f32 %v193, 1e-24
    %v233 = vmax.f32 %v195, 1e-24
    %v234 = vmax.f32 %v197, 1e-24
    %v235 = vmax.f32 %v199, 1e-24
    %v236 = vmax.f32 %v201, 1e-24
    %v237 = vmax.f32 %v203, 1e-24
    %v238 = vmax.f32 %v205, 1e-24
    %v239 = vmax.f32 %v207, 1e-24
    %v240 = vrsqrt.pop %v208
    %v241 = vmul.f32 %v240, %v208
    %v242 = vmul.f32 %v241, %v240
    %v243 = vmul.f32 0.5, %v242
    %v244 = vsub.f32 1.5, %v243
    %v245 = vmul.f32 %v240, %v244
    %vm246 = vweird.f32 %v208
    %vm247 = vweird.f32 %v240
    %vm248 = vmor %vm246, %vm247
    %v249 = vsel %vm248, %v240, %v245
    %v250 = vrsqrt.pop %v209
    %v251 = vmul.f32 %v250, %v209
    %v252 = vmul.f32 %v251, %v250
    %v253 = vmul.f32 0.5, %v252
    %v254 = vsub.f32 1.5, %v253
    %v255 = vmul.f32 %v250, %v254
    %vm256 = vweird.f32 %v209
    %vm257 = vweird.f32 %v250
    %vm258 = vmor %vm256, %vm257
    %v259 = vsel %vm258, %v250, %v255
    %v260 = vrsqrt.pop %v210
    %v261 = vmul.f32 %v260, %v210
    %v262 = vmul.f32 %v261, %v260
    %v263 = vmul.f32 0.5, %v262
    %v264 = vsub.f32 1.5, %v263
    %v265 = vmul.f32 %v260, %v264
    %vm266 = vweird.f32 %v210
    %vm267 = vweird.f32 %v260
    %vm268 = vmor %vm266, %vm267
    %v269 = vsel %vm268, %v260, %v265
    %v270 = vrsqrt.pop %v211
    %v271 = vmul.f32 %v270, %v211
    %v272 = vmul.f32 %v271, %v270
    %v273 = vmul.f32 0.5, %v272
    %v274 = vsub.f32 1.5, %v273
    %v275 = vmul.f32 %v270, %v274
    %vm276 = vweird.f32 %v211
    %vm277 = vweird.f32 %v270
    %vm278 = vmor %vm276, %vm277
    %v279 = vsel %vm278, %v270, %v275
    %v280 = vrsqrt.pop %v212
    %v281 = vmul.f32 %v280, %v212
    %v282 = vmul.f32 %v281, %v280
    %v283 = vmul.f32 0.5, %v282
    %v284 = vsub.f32 1.5, %v283
    %v285 = vmul.f32 %v280, %v284
    %vm286 = vweird.f32 %v212
    %vm287 = vweird.f32 %v280
    %vm288 = vmor %vm286, %vm287
    %v289 = vsel %vm288, %v280, %v285
    %v290 = vrsqrt.pop %v213
    %v291 = vmul.f32 %v290, %v213
    %v292 = vmul.f32 %v291, %v290
    %v293 = vmul.f32 0.5, %v292
    %v294 = vsub.f32 1.5, %v293
    %v295 = vmul.f32 %v290, %v294
    %vm296 = vweird.f32 %v213
    %vm297 = vweird.f32 %v290
    %vm298 = vmor %vm296, %vm297
    %v299 = vsel %vm298, %v290, %v295
    %v300 = vrsqrt.pop %v214
    %v301 = vmul.f32 %v300, %v214
    %v302 = vmul.f32 %v301, %v300
    %v303 = vmul.f32 0.5, %v302
    %v304 = vsub.f32 1.5, %v303
    %v305 = vmul.f32 %v300, %v304
    %vm306 = vweird.f32 %v214
    %vm307 = vweird.f32 %v300
    %vm308 = vmor %vm306, %vm307
    %v309 = vsel %vm308, %v300, %v305
    %v310 = vrsqrt.pop %v215
    %v311 = vmul.f32 %v310, %v215
    %v312 = vmul.f32 %v311, %v310
    %v313 = vmul.f32 0.5, %v312
    %v314 = vsub.f32 1.5, %v313
    %v315 = vmul.f32 %v310, %v314
    %vm316 = vweird.f32 %v215
    %vm317 = vweird.f32 %v310
    %vm318 = vmor %vm316, %vm317
    %v319 = vsel %vm318, %v310, %v315
    %v320 = vrsqrt.pop %v216
    %v321 = vmul.f32 %v320, %v216
    %v322 = vmul.f32 %v321, %v320
    %v323 = vmul.f32 0.5, %v322
    %v324 = vsub.f32 1.5, %v323
    %v325 = vmul.f32 %v320, %v324
    %vm326 = vweird.f32 %v216
    %vm327 = vweird.f32 %v320
    %vm328 = vmor %vm326, %vm327
    %v329 = vsel %vm328, %v320, %v325
    %v330 = vrsqrt.pop %v217
    %v331 = vmul.f32 %v330, %v217
    %v332 = vmul.f32 %v331, %v330
    %v333 = vmul.f32 0.5, %v332
    %v334 = vsub.f32 1.5, %v333
    %v335 = vmul.f32 %v330, %v334
    %vm336 = vweird.f32 %v217
    %vm337 = vweird.f32 %v330
    %vm338 = vmor %vm336, %vm337
    %v339 = vsel %vm338, %v330, %v335
    %v340 = vrsqrt.pop %v218
    %v341 = vmul.f32 %v340, %v218
    %v342 = vmul.f32 %v341, %v340
    %v343 = vmul.f32 0.5, %v342
    %v344 = vsub.f32 1.5, %v343
    %v345 = vmul.f32 %v340, %v344
    %vm346 = vweird.f32 %v218
    %vm347 = vweird.f32 %v340
    %vm348 = vmor %vm346, %vm347
    %v349 = vsel %vm348, %v340, %v345
    %v350 = vrsqrt.pop %v219
    %v351 = vmul.f32 %v350, %v219
    %v352 = vmul.f32 %v351, %v350
    %v353 = vmul.f32 0.5, %v352
    %v354 = vsub.f32 1.5, %v353
    %v355 = vmul.f32 %v350, %v354
    %vm356 = vweird.f32 %v219
    %vm357 = vweird.f32 %v350
    %vm358 = vmor %vm356, %vm357
    %v359 = vsel %vm358, %v350, %v355
    %v360 = vrsqrt.pop %v220
    %v361 = vmul.f32 %v360, %v220
    %v362 = vmul.f32 %v361, %v360
    %v363 = vmul.f32 0.5, %v362
    %v364 = vsub.f32 1.5, %v363
    %v365 = vmul.f32 %v360, %v364
    %vm366 = vweird.f32 %v220
    %vm367 = vweird.f32 %v360
    %vm368 = vmor %vm366, %vm367
    %v369 = vsel %vm368, %v360, %v365
    %v370 = vrsqrt.pop %v221
    %v371 = vmul.f32 %v370, %v221
    %v372 = vmul.f32 %v371, %v370
    %v373 = vmul.f32 0.5, %v372
    %v374 = vsub.f32 1.5, %v373
    %v375 = vmul.f32 %v370, %v374
    %vm376 = vweird.f32 %v221
    %vm377 = vweird.f32 %v370
    %vm378 = vmor %vm376, %vm377
    %v379 = vsel %vm378, %v370, %v375
    %v380 = vrsqrt.pop %v222
    %v381 = vmul.f32 %v380, %v222
    %v382 = vmul.f32 %v381, %v380
    %v383 = vmul.f32 0.5, %v382
    %v384 = vsub.f32 1.5, %v383
    %v385 = vmul.f32 %v380, %v384
    %vm386 = vweird.f32 %v222
    %vm387 = vweird.f32 %v380
    %vm388 = vmor %vm386, %vm387
    %v389 = vsel %vm388, %v380, %v385
    %v390 = vrsqrt.pop %v223
    %v391 = vmul.f32 %v390, %v223
    %v392 = vmul.f32 %v391, %v390
    %v393 = vmul.f32 0.5, %v392
    %v394 = vsub.f32 1.5, %v393
    %v395 = vmul.f32 %v390, %v394
    %vm396 = vweird.f32 %v223
    %vm397 = vweird.f32 %v390
    %vm398 = vmor %vm396, %vm397
    %v399 = vsel %vm398, %v390, %v395
    %v400 = vrsqrt.pop %v224
    %v401 = vmul.f32 %v400, %v224
    %v402 = vmul.f32 %v401, %v400
    %v403 = vmul.f32 0.5, %v402
    %v404 = vsub.f32 1.5, %v403
    %v405 = vmul.f32 %v400, %v404
    %vm406 = vweird.f32 %v224
    %vm407 = vweird.f32 %v400
    %vm408 = vmor %vm406, %vm407
    %v409 = vsel %vm408, %v400, %v405
    %v410 = vrsqrt.pop %v225
    %v411 = vmul.f32 %v410, %v225
    %v412 = vmul.f32 %v411, %v410
    %v413 = vmul.f32 0.5, %v412
    %v414 = vsub.f32 1.5, %v413
    %v415 = vmul.f32 %v410, %v414
    %vm416 = vweird.f32 %v225
    %vm417 = vweird.f32 %v410
    %vm418 = vmor %vm416, %vm417
    %v419 = vsel %vm418, %v410, %v415
    %v420 = vrsqrt.pop %v226
    %v421 = vmul.f32 %v420, %v226
    %v422 = vmul.f32 %v421, %v420
    %v423 = vmul.f32 0.5, %v422
    %v424 = vsub.f32 1.5, %v423
    %v425 = vmul.f32 %v420, %v424
    %vm426 = vweird.f32 %v226
    %vm427 = vweird.f32 %v420
    %vm428 = vmor %vm426, %vm427
    %v429 = vsel %vm428, %v420, %v425
    %v430 = vrsqrt.pop %v227
    %v431 = vmul.f32 %v430, %v227
    %v432 = vmul.f32 %v431, %v430
    %v433 = vmul.f32 0.5, %v432
    %v434 = vsub.f32 1.5, %v433
    %v435 = vmul.f32 %v430, %v434
    %vm436 = vweird.f32 %v227
    %vm437 = vweird.f32 %v430
    %vm438 = vmor %vm436, %vm437
    %v439 = vsel %vm438, %v430, %v435
    %v440 = vrsqrt.pop %v228
    %v441 = vmul.f32 %v440, %v228
    %v442 = vmul.f32 %v441, %v440
    %v443 = vmul.f32 0.5, %v442
    %v444 = vsub.f32 1.5, %v443
    %v445 = vmul.f32 %v440, %v444
    %vm446 = vweird.f32 %v228
    %vm447 = vweird.f32 %v440
    %vm448 = vmor %vm446, %vm447
    %v449 = vsel %vm448, %v440, %v445
    %v450 = vrsqrt.pop %v229
    %v451 = vmul.f32 %v450, %v229
    %v452 = vmul.f32 %v451, %v450
    %v453 = vmul.f32 0.5, %v452
    %v454 = vsub.f32 1.5, %v453
    %v455 = vmul.f32 %v450, %v454
    %vm456 = vweird.f32 %v229
    %vm457 = vweird.f32 %v450
    %vm458 = vmor %vm456, %vm457
    %v459 = vsel %vm458, %v450, %v455
    %v460 = vrsqrt.pop %v230
    %v461 = vmul.f32 %v460, %v230
    %v462 = vmul.f32 %v461, %v460
    %v463 = vmul.f32 0.5, %v462
    %v464 = vsub.f32 1.5, %v463
    %v465 = vmul.f32 %v460, %v464
    %vm466 = vweird.f32 %v230
    %vm467 = vweird.f32 %v460
    %vm468 = vmor %vm466, %vm467
    %v469 = vsel %vm468, %v460, %v465
    %v470 = vrsqrt.pop %v231
    %v471 = vmul.f32 %v470, %v231
    %v472 = vmul.f32 %v471, %v470
    %v473 = vmul.f32 0.5, %v472
    %v474 = vsub.f32 1.5, %v473
    %v475 = vmul.f32 %v470, %v474
    %vm476 = vweird.f32 %v231
    %vm477 = vweird.f32 %v470
    %vm478 = vmor %vm476, %vm477
    %v479 = vsel %vm478, %v470, %v475
    %v480 = vrsqrt.pop %v232
    %v481 = vmul.f32 %v480, %v232
    %v482 = vmul.f32 %v481, %v480
    %v483 = vmul.f32 0.5, %v482
    %v484 = vsub.f32 1.5, %v483
    %v485 = vmul.f32 %v480, %v484
    %vm486 = vweird.f32 %v232
    %vm487 = vweird.f32 %v480
    %vm488 = vmor %vm486, %vm487
    %v489 = vsel %vm488, %v480, %v485
    %v490 = vrsqrt.pop %v233
    %v491 = vmul.f32 %v490, %v233
    %v492 = vmul.f32 %v491, %v490
    %v493 = vmul.f32 0.5, %v492
    %v494 = vsub.f32 1.5, %v493
    %v495 = vmul.f32 %v490, %v494
    %vm496 = vweird.f32 %v233
    %vm497 = vweird.f32 %v490
    %vm498 = vmor %vm496, %vm497
    %v499 = vsel %vm498, %v490, %v495
    %v500 = vrsqrt.pop %v234
    %v501 = vmul.f32 %v500, %v234
    %v502 = vmul.f32 %v501, %v500
    %v503 = vmul.f32 0.5, %v502
    %v504 = vsub.f32 1.5, %v503
    %v505 = vmul.f32 %v500, %v504
    %vm506 = vweird.f32 %v234
    %vm507 = vweird.f32 %v500
    %vm508 = vmor %vm506, %vm507
    %v509 = vsel %vm508, %v500, %v505
    %v510 = vrsqrt.pop %v235
    %v511 = vmul.f32 %v510, %v235
    %v512 = vmul.f32 %v511, %v510
    %v513 = vmul.f32 0.5, %v512
    %v514 = vsub.f32 1.5, %v513
    %v515 = vmul.f32 %v510, %v514
    %vm516 = vweird.f32 %v235
    %vm517 = vweird.f32 %v510
    %vm518 = vmor %vm516, %vm517
    %v519 = vsel %vm518, %v510, %v515
    %v520 = vrsqrt.pop %v236
    %v521 = vmul.f32 %v520, %v236
    %v522 = vmul.f32 %v521, %v520
    %v523 = vmul.f32 0.5, %v522
    %v524 = vsub.f32 1.5, %v523
    %v525 = vmul.f32 %v520, %v524
    %vm526 = vweird.f32 %v236
    %vm527 = vweird.f32 %v520
    %vm528 = vmor %vm526, %vm527
    %v529 = vsel %vm528, %v520, %v525
    %v530 = vrsqrt.pop %v237
    %v531 = vmul.f32 %v530, %v237
    %v532 = vmul.f32 %v531, %v530
    %v533 = vmul.f32 0.5, %v532
    %v534 = vsub.f32 1.5, %v533
    %v535 = vmul.f32 %v530, %v534
    %vm536 = vweird.f32 %v237
    %vm537 = vweird.f32 %v530
    %vm538 = vmor %vm536, %vm537
    %v539 = vsel %vm538, %v530, %v535
    %v540 = vrsqrt.pop %v238
    %v541 = vmul.f32 %v540, %v238
    %v542 = vmul.f32 %v541, %v540
    %v543 = vmul.f32 0.5, %v542
    %v544 = vsub.f32 1.5, %v543
    %v545 = vmul.f32 %v540, %v544
    %vm546 = vweird.f32 %v238
    %vm547 = vweird.f32 %v540
    %vm548 = vmor %vm546, %vm547
    %v549 = vsel %vm548, %v540, %v545
    %v550 = vrsqrt.pop %v239
    %v551 = vmul.f32 %v550, %v239
    %v552 = vmul.f32 %v551, %v550
    %v553 = vmul.f32 0.5, %v552
    %v554 = vsub.f32 1.5, %v553
    %v555 = vmul.f32 %v550, %v554
    %vm556 = vweird.f32 %v239
    %vm557 = vweird.f32 %v550
    %vm558 = vmor %vm556, %vm557
    %v559 = vsel %vm558, %v550, %v555
    %v560 = vmul.f32 %v80, %v80
    %v561 = vmul.f32 %v81, %v81
    %v562 = vmul.f32 %v82, %v82
    %v563 = vmul.f32 %v83, %v83
    %v564 = vmul.f32 %v84, %v84
    %v565 = vmul.f32 %v85, %v85
    %v566 = vmul.f32 %v86, %v86
    %v567 = vmul.f32 %v87, %v87
    %v568 = vmul.f32 %v88, %v88
    %v569 = vmul.f32 %v89, %v89
    %v570 = vmul.f32 %v90, %v90
    %v571 = vmul.f32 %v91, %v91
    %v572 = vmul.f32 %v92, %v92
    %v573 = vmul.f32 %v93, %v93
    %v574 = vmul.f32 %v94, %v94
    %v575 = vmul.f32 %v95, %v95
    %v576 = vmul.f32 %v96, %v96
    %v577 = vmul.f32 %v97, %v97
    %v578 = vmul.f32 %v98, %v98
    %v579 = vmul.f32 %v99, %v99
    %v580 = vmul.f32 %v100, %v100
    %v581 = vmul.f32 %v101, %v101
    %v582 = vmul.f32 %v102, %v102
    %v583 = vmul.f32 %v103, %v103
    %v584 = vmul.f32 %v104, %v104
    %v585 = vmul.f32 %v105, %v105
    %v586 = vmul.f32 %v106, %v106
    %v587 = vmul.f32 %v107, %v107
    %v588 = vmul.f32 %v108, %v108
    %v589 = vmul.f32 %v109, %v109
    %v590 = vmul.f32 %v110, %v110
    %v591 = vmul.f32 %v111, %v111
    %592 = vadd.xlane.f32.xlu0 %v560
    %v593 = vpop.xlane.xlu0 %592
    %594 = vadd.xlane.f32.xlu0 %v561
    %v595 = vpop.xlane.xlu0 %594
    %596 = vadd.xlane.f32.xlu0 %v562
    %v597 = vpop.xlane.xlu0 %596
    %598 = vadd.xlane.f32.xlu0 %v563
    %v599 = vpop.xlane.xlu0 %598
    %600 = vadd.xlane.f32.xlu0 %v564
    %v601 = vpop.xlane.xlu0 %600
    %602 = vadd.xlane.f32.xlu0 %v565
    %v603 = vpop.xlane.xlu0 %602
    %604 = vadd.xlane.f32.xlu0 %v566
    %v605 = vpop.xlane.xlu0 %604
    %606 = vadd.xlane.f32.xlu0 %v567
    %v607 = vpop.xlane.xlu0 %606
    %608 = vadd.xlane.f32.xlu0 %v568
    %v609 = vpop.xlane.xlu0 %608
    %610 = vadd.xlane.f32.xlu0 %v569
    %v611 = vpop.xlane.xlu0 %610
    %612 = vadd.xlane.f32.xlu0 %v570
    %v613 = vpop.xlane.xlu0 %612
    %614 = vadd.xlane.f32.xlu0 %v571
    %v615 = vpop.xlane.xlu0 %614
    %616 = vadd.xlane.f32.xlu0 %v572
    %v617 = vpop.xlane.xlu0 %616
    %618 = vadd.xlane.f32.xlu0 %v573
    %v619 = vpop.xlane.xlu0 %618
    %620 = vadd.xlane.f32.xlu0 %v574
    %v621 = vpop.xlane.xlu0 %620
    %622 = vadd.xlane.f32.xlu0 %v575
    %v623 = vpop.xlane.xlu0 %622
    %624 = vadd.xlane.f32.xlu0 %v576
    %v625 = vpop.xlane.xlu0 %624
    %626 = vadd.xlane.f32.xlu0 %v577
    %v627 = vpop.xlane.xlu0 %626
    %628 = vadd.xlane.f32.xlu0 %v578
    %v629 = vpop.xlane.xlu0 %628
    %630 = vadd.xlane.f32.xlu0 %v579
    %v631 = vpop.xlane.xlu0 %630
    %632 = vadd.xlane.f32.xlu0 %v580
    %v633 = vpop.xlane.xlu0 %632
    %634 = vadd.xlane.f32.xlu0 %v581
    %v635 = vpop.xlane.xlu0 %634
    %636 = vadd.xlane.f32.xlu0 %v582
    %v637 = vpop.xlane.xlu0 %636
    %638 = vadd.xlane.f32.xlu0 %v583
    %v639 = vpop.xlane.xlu0 %638
    %640 = vadd.xlane.f32.xlu0 %v584
    %v641 = vpop.xlane.xlu0 %640
    %642 = vadd.xlane.f32.xlu0 %v585
    %v643 = vpop.xlane.xlu0 %642
    %644 = vadd.xlane.f32.xlu0 %v586
    %v645 = vpop.xlane.xlu0 %644
    %646 = vadd.xlane.f32.xlu0 %v587
    %v647 = vpop.xlane.xlu0 %646
    %648 = vadd.xlane.f32.xlu0 %v588
    %v649 = vpop.xlane.xlu0 %648
    %650 = vadd.xlane.f32.xlu0 %v589
    %v651 = vpop.xlane.xlu0 %650
    %652 = vadd.xlane.f32.xlu0 %v590
    %v653 = vpop.xlane.xlu0 %652
    %654 = vadd.xlane.f32.xlu0 %v591
    %v655 = vpop.xlane.xlu0 %654
    %v656 = vmax.f32 %v593, 1e-24
    %v657 = vmax.f32 %v595, 1e-24
    %v658 = vmax.f32 %v597, 1e-24
    %v659 = vmax.f32 %v599, 1e-24
    %v660 = vmax.f32 %v601, 1e-24
    %v661 = vmax.f32 %v603, 1e-24
    %v662 = vmax.f32 %v605, 1e-24
    %v663 = vmax.f32 %v607, 1e-24
    %v664 = vmax.f32 %v609, 1e-24
    %v665 = vmax.f32 %v611, 1e-24
    %v666 = vmax.f32 %v613, 1e-24
    %v667 = vmax.f32 %v615, 1e-24
    %v668 = vmax.f32 %v617, 1e-24
    %v669 = vmax.f32 %v619, 1e-24
    %v670 = vmax.f32 %v621, 1e-24
    %v671 = vmax.f32 %v623, 1e-24
    %v672 = vmax.f32 %v625, 1e-24
    %v673 = vmax.f32 %v627, 1e-24
    %v674 = vmax.f32 %v629, 1e-24
    %v675 = vmax.f32 %v631, 1e-24
    %v676 = vmax.f32 %v633, 1e-24
    %v677 = vmax.f32 %v635, 1e-24
    %v678 = vmax.f32 %v637, 1e-24
    %v679 = vmax.f32 %v639, 1e-24
    %v680 = vmax.f32 %v641, 1e-24
    %v681 = vmax.f32 %v643, 1e-24
    %v682 = vmax.f32 %v645, 1e-24
    %v683 = vmax.f32 %v647, 1e-24
    %v684 = vmax.f32 %v649, 1e-24
    %v685 = vmax.f32 %v651, 1e-24
    %v686 = vmax.f32 %v653, 1e-24
    %v687 = vmax.f32 %v655, 1e-24
    %v688 = vrsqrt.pop %v656
    %v689 = vmul.f32 %v688, %v656
    %v690 = vmul.f32 %v689, %v688
    %v691 = vmul.f32 0.5, %v690
    %v692 = vsub.f32 1.5, %v691
    %v693 = vmul.f32 %v688, %v692
    %vm694 = vweird.f32 %v656
    %vm695 = vweird.f32 %v688
    %vm696 = vmor %vm694, %vm695
    %v697 = vsel %vm696, %v688, %v693
    %v698 = vrsqrt.pop %v657
    %v699 = vmul.f32 %v698, %v657
    %v700 = vmul.f32 %v699, %v698
    %v701 = vmul.f32 0.5, %v700
    %v702 = vsub.f32 1.5, %v701
    %v703 = vmul.f32 %v698, %v702
    %vm704 = vweird.f32 %v657
    %vm705 = vweird.f32 %v698
    %vm706 = vmor %vm704, %vm705
    %v707 = vsel %vm706, %v698, %v703
    %v708 = vrsqrt.pop %v658
    %v709 = vmul.f32 %v708, %v658
    %v710 = vmul.f32 %v709, %v708
    %v711 = vmul.f32 0.5, %v710
    %v712 = vsub.f32 1.5, %v711
    %v713 = vmul.f32 %v708, %v712
    %vm714 = vweird.f32 %v658
    %vm715 = vweird.f32 %v708
    %vm716 = vmor %vm714, %vm715
    %v717 = vsel %vm716, %v708, %v713
    %v718 = vrsqrt.pop %v659
    %v719 = vmul.f32 %v718, %v659
    %v720 = vmul.f32 %v719, %v718
    %v721 = vmul.f32 0.5, %v720
    %v722 = vsub.f32 1.5, %v721
    %v723 = vmul.f32 %v718, %v722
    %vm724 = vweird.f32 %v659
    %vm725 = vweird.f32 %v718
    %vm726 = vmor %vm724, %vm725
    %v727 = vsel %vm726, %v718, %v723
    %v728 = vrsqrt.pop %v660
    %v729 = vmul.f32 %v728, %v660
    %v730 = vmul.f32 %v729, %v728
    %v731 = vmul.f32 0.5, %v730
    %v732 = vsub.f32 1.5, %v731
    %v733 = vmul.f32 %v728, %v732
    %vm734 = vweird.f32 %v660
    %vm735 = vweird.f32 %v728
    %vm736 = vmor %vm734, %vm735
    %v737 = vsel %vm736, %v728, %v733
    %v738 = vrsqrt.pop %v661
    %v739 = vmul.f32 %v738, %v661
    %v740 = vmul.f32 %v739, %v738
    %v741 = vmul.f32 0.5, %v740
    %v742 = vsub.f32 1.5, %v741
    %v743 = vmul.f32 %v738, %v742
    %vm744 = vweird.f32 %v661
    %vm745 = vweird.f32 %v738
    %vm746 = vmor %vm744, %vm745
    %v747 = vsel %vm746, %v738, %v743
    %v748 = vrsqrt.pop %v662
    %v749 = vmul.f32 %v748, %v662
    %v750 = vmul.f32 %v749, %v748
    %v751 = vmul.f32 0.5, %v750
    %v752 = vsub.f32 1.5, %v751
    %v753 = vmul.f32 %v748, %v752
    %vm754 = vweird.f32 %v662
    %vm755 = vweird.f32 %v748
    %vm756 = vmor %vm754, %vm755
    %v757 = vsel %vm756, %v748, %v753
    %v758 = vrsqrt.pop %v663
    %v759 = vmul.f32 %v758, %v663
    %v760 = vmul.f32 %v759, %v758
    %v761 = vmul.f32 0.5, %v760
    %v762 = vsub.f32 1.5, %v761
    %v763 = vmul.f32 %v758, %v762
    %vm764 = vweird.f32 %v663
    %vm765 = vweird.f32 %v758
    %vm766 = vmor %vm764, %vm765
    %v767 = vsel %vm766, %v758, %v763
    %v768 = vrsqrt.pop %v664
    %v769 = vmul.f32 %v768, %v664
    %v770 = vmul.f32 %v769, %v768
    %v771 = vmul.f32 0.5, %v770
    %v772 = vsub.f32 1.5, %v771
    %v773 = vmul.f32 %v768, %v772
    %vm774 = vweird.f32 %v664
    %vm775 = vweird.f32 %v768
    %vm776 = vmor %vm774, %vm775
    %v777 = vsel %vm776, %v768, %v773
    %v778 = vrsqrt.pop %v665
    %v779 = vmul.f32 %v778, %v665
    %v780 = vmul.f32 %v779, %v778
    %v781 = vmul.f32 0.5, %v780
    %v782 = vsub.f32 1.5, %v781
    %v783 = vmul.f32 %v778, %v782
    %vm784 = vweird.f32 %v665
    %vm785 = vweird.f32 %v778
    %vm786 = vmor %vm784, %vm785
    %v787 = vsel %vm786, %v778, %v783
    %v788 = vrsqrt.pop %v666
    %v789 = vmul.f32 %v788, %v666
    %v790 = vmul.f32 %v789, %v788
    %v791 = vmul.f32 0.5, %v790
    %v792 = vsub.f32 1.5, %v791
    %v793 = vmul.f32 %v788, %v792
    %vm794 = vweird.f32 %v666
    %vm795 = vweird.f32 %v788
    %vm796 = vmor %vm794, %vm795
    %v797 = vsel %vm796, %v788, %v793
    %v798 = vrsqrt.pop %v667
    %v799 = vmul.f32 %v798, %v667
    %v800 = vmul.f32 %v799, %v798
    %v801 = vmul.f32 0.5, %v800
    %v802 = vsub.f32 1.5, %v801
    %v803 = vmul.f32 %v798, %v802
    %vm804 = vweird.f32 %v667
    %vm805 = vweird.f32 %v798
    %vm806 = vmor %vm804, %vm805
    %v807 = vsel %vm806, %v798, %v803
    %v808 = vrsqrt.pop %v668
    %v809 = vmul.f32 %v808, %v668
    %v810 = vmul.f32 %v809, %v808
    %v811 = vmul.f32 0.5, %v810
    %v812 = vsub.f32 1.5, %v811
    %v813 = vmul.f32 %v808, %v812
    %vm814 = vweird.f32 %v668
    %vm815 = vweird.f32 %v808
    %vm816 = vmor %vm814, %vm815
    %v817 = vsel %vm816, %v808, %v813
    %v818 = vrsqrt.pop %v669
    %v819 = vmul.f32 %v818, %v669
    %v820 = vmul.f32 %v819, %v818
    %v821 = vmul.f32 0.5, %v820
    %v822 = vsub.f32 1.5, %v821
    %v823 = vmul.f32 %v818, %v822
    %vm824 = vweird.f32 %v669
    %vm825 = vweird.f32 %v818
    %vm826 = vmor %vm824, %vm825
    %v827 = vsel %vm826, %v818, %v823
    %v828 = vrsqrt.pop %v670
    %v829 = vmul.f32 %v828, %v670
    %v830 = vmul.f32 %v829, %v828
    %v831 = vmul.f32 0.5, %v830
    %v832 = vsub.f32 1.5, %v831
    %v833 = vmul.f32 %v828, %v832
    %vm834 = vweird.f32 %v670
    %vm835 = vweird.f32 %v828
    %vm836 = vmor %vm834, %vm835
    %v837 = vsel %vm836, %v828, %v833
    %v838 = vrsqrt.pop %v671
    %v839 = vmul.f32 %v838, %v671
    %v840 = vmul.f32 %v839, %v838
    %v841 = vmul.f32 0.5, %v840
    %v842 = vsub.f32 1.5, %v841
    %v843 = vmul.f32 %v838, %v842
    %vm844 = vweird.f32 %v671
    %vm845 = vweird.f32 %v838
    %vm846 = vmor %vm844, %vm845
    %v847 = vsel %vm846, %v838, %v843
    %v848 = vrsqrt.pop %v672
    %v849 = vmul.f32 %v848, %v672
    %v850 = vmul.f32 %v849, %v848
    %v851 = vmul.f32 0.5, %v850
    %v852 = vsub.f32 1.5, %v851
    %v853 = vmul.f32 %v848, %v852
    %vm854 = vweird.f32 %v672
    %vm855 = vweird.f32 %v848
    %vm856 = vmor %vm854, %vm855
    %v857 = vsel %vm856, %v848, %v853
    %v858 = vrsqrt.pop %v673
    %v859 = vmul.f32 %v858, %v673
    %v860 = vmul.f32 %v859, %v858
    %v861 = vmul.f32 0.5, %v860
    %v862 = vsub.f32 1.5, %v861
    %v863 = vmul.f32 %v858, %v862
    %vm864 = vweird.f32 %v673
    %vm865 = vweird.f32 %v858
    %vm866 = vmor %vm864, %vm865
    %v867 = vsel %vm866, %v858, %v863
    %v868 = vrsqrt.pop %v674
    %v869 = vmul.f32 %v868, %v674
    %v870 = vmul.f32 %v869, %v868
    %v871 = vmul.f32 0.5, %v870
    %v872 = vsub.f32 1.5, %v871
    %v873 = vmul.f32 %v868, %v872
    %vm874 = vweird.f32 %v674
    %vm875 = vweird.f32 %v868
    %vm876 = vmor %vm874, %vm875
    %v877 = vsel %vm876, %v868, %v873
    %v878 = vrsqrt.pop %v675
    %v879 = vmul.f32 %v878, %v675
    %v880 = vmul.f32 %v879, %v878
    %v881 = vmul.f32 0.5, %v880
    %v882 = vsub.f32 1.5, %v881
    %v883 = vmul.f32 %v878, %v882
    %vm884 = vweird.f32 %v675
    %vm885 = vweird.f32 %v878
    %vm886 = vmor %vm884, %vm885
    %v887 = vsel %vm886, %v878, %v883
    %v888 = vrsqrt.pop %v676
    %v889 = vmul.f32 %v888, %v676
    %v890 = vmul.f32 %v889, %v888
    %v891 = vmul.f32 0.5, %v890
    %v892 = vsub.f32 1.5, %v891
    %v893 = vmul.f32 %v888, %v892
    %vm894 = vweird.f32 %v676
    %vm895 = vweird.f32 %v888
    %vm896 = vmor %vm894, %vm895
    %v897 = vsel %vm896, %v888, %v893
    %v898 = vrsqrt.pop %v677
    %v899 = vmul.f32 %v898, %v677
    %v900 = vmul.f32 %v899, %v898
    %v901 = vmul.f32 0.5, %v900
    %v902 = vsub.f32 1.5, %v901
    %v903 = vmul.f32 %v898, %v902
    %vm904 = vweird.f32 %v677
    %vm905 = vweird.f32 %v898
    %vm906 = vmor %vm904, %vm905
    %v907 = vsel %vm906, %v898, %v903
    %v908 = vrsqrt.pop %v678
    %v909 = vmul.f32 %v908, %v678
    %v910 = vmul.f32 %v909, %v908
    %v911 = vmul.f32 0.5, %v910
    %v912 = vsub.f32 1.5, %v911
    %v913 = vmul.f32 %v908, %v912
    %vm914 = vweird.f32 %v678
    %vm915 = vweird.f32 %v908
    %vm916 = vmor %vm914, %vm915
    %v917 = vsel %vm916, %v908, %v913
    %v918 = vrsqrt.pop %v679
    %v919 = vmul.f32 %v918, %v679
    %v920 = vmul.f32 %v919, %v918
    %v921 = vmul.f32 0.5, %v920
    %v922 = vsub.f32 1.5, %v921
    %v923 = vmul.f32 %v918, %v922
    %vm924 = vweird.f32 %v679
    %vm925 = vweird.f32 %v918
    %vm926 = vmor %vm924, %vm925
    %v927 = vsel %vm926, %v918, %v923
    %v928 = vrsqrt.pop %v680
    %v929 = vmul.f32 %v928, %v680
    %v930 = vmul.f32 %v929, %v928
    %v931 = vmul.f32 0.5, %v930
    %v932 = vsub.f32 1.5, %v931
    %v933 = vmul.f32 %v928, %v932
    %vm934 = vweird.f32 %v680
    %vm935 = vweird.f32 %v928
    %vm936 = vmor %vm934, %vm935
    %v937 = vsel %vm936, %v928, %v933
    %v938 = vrsqrt.pop %v681
    %v939 = vmul.f32 %v938, %v681
    %v940 = vmul.f32 %v939, %v938
    %v941 = vmul.f32 0.5, %v940
    %v942 = vsub.f32 1.5, %v941
    %v943 = vmul.f32 %v938, %v942
    %vm944 = vweird.f32 %v681
    %vm945 = vweird.f32 %v938
    %vm946 = vmor %vm944, %vm945
    %v947 = vsel %vm946, %v938, %v943
    %v948 = vrsqrt.pop %v682
    %v949 = vmul.f32 %v948, %v682
    %v950 = vmul.f32 %v949, %v948
    %v951 = vmul.f32 0.5, %v950
    %v952 = vsub.f32 1.5, %v951
    %v953 = vmul.f32 %v948, %v952
    %vm954 = vweird.f32 %v682
    %vm955 = vweird.f32 %v948
    %vm956 = vmor %vm954, %vm955
    %v957 = vsel %vm956, %v948, %v953
    %v958 = vrsqrt.pop %v683
    %v959 = vmul.f32 %v958, %v683
    %v960 = vmul.f32 %v959, %v958
    %v961 = vmul.f32 0.5, %v960
    %v962 = vsub.f32 1.5, %v961
    %v963 = vmul.f32 %v958, %v962
    %vm964 = vweird.f32 %v683
    %vm965 = vweird.f32 %v958
    %vm966 = vmor %vm964, %vm965
    %v967 = vsel %vm966, %v958, %v963
    %v968 = vrsqrt.pop %v684
    %v969 = vmul.f32 %v968, %v684
    %v970 = vmul.f32 %v969, %v968
    %v971 = vmul.f32 0.5, %v970
    %v972 = vsub.f32 1.5, %v971
    %v973 = vmul.f32 %v968, %v972
    %vm974 = vweird.f32 %v684
    %vm975 = vweird.f32 %v968
    %vm976 = vmor %vm974, %vm975
    %v977 = vsel %vm976, %v968, %v973
    %v978 = vrsqrt.pop %v685
    %v979 = vmul.f32 %v978, %v685
    %v980 = vmul.f32 %v979, %v978
    %v981 = vmul.f32 0.5, %v980
    %v982 = vsub.f32 1.5, %v981
    %v983 = vmul.f32 %v978, %v982
    %vm984 = vweird.f32 %v685
    %vm985 = vweird.f32 %v978
    %vm986 = vmor %vm984, %vm985
    %v987 = vsel %vm986, %v978, %v983
    %v988 = vrsqrt.pop %v686
    %v989 = vmul.f32 %v988, %v686
    %v990 = vmul.f32 %v989, %v988
    %v991 = vmul.f32 0.5, %v990
    %v992 = vsub.f32 1.5, %v991
    %v993 = vmul.f32 %v988, %v992
    %vm994 = vweird.f32 %v686
    %vm995 = vweird.f32 %v988
    %vm996 = vmor %vm994, %vm995
    %v997 = vsel %vm996, %v988, %v993
    %v998 = vrsqrt.pop %v687
    %v999 = vmul.f32 %v998, %v687
    %v1000 = vmul.f32 %v999, %v998
    %v1001 = vmul.f32 0.5, %v1000
    %v1002 = vsub.f32 1.5, %v1001
    %v1003 = vmul.f32 %v998, %v1002
    %vm1004 = vweird.f32 %v687
    %vm1005 = vweird.f32 %v998
    %vm1006 = vmor %vm1004, %vm1005
    %v1007 = vsel %vm1006, %v998, %v1003
    %v1008 = vmul.f32 %v249, 12.5
    %v1009 = vmul.f32 %v259, 12.5
    %v1010 = vmul.f32 %v269, 12.5
    %v1011 = vmul.f32 %v279, 12.5
    %v1012 = vmul.f32 %v289, 12.5
    %v1013 = vmul.f32 %v299, 12.5
    %v1014 = vmul.f32 %v309, 12.5
    %v1015 = vmul.f32 %v319, 12.5
    %v1016 = vmul.f32 %v329, 12.5
    %v1017 = vmul.f32 %v339, 12.5
    %v1018 = vmul.f32 %v349, 12.5
    %v1019 = vmul.f32 %v359, 12.5
    %v1020 = vmul.f32 %v369, 12.5
    %v1021 = vmul.f32 %v379, 12.5
    %v1022 = vmul.f32 %v389, 12.5
    %v1023 = vmul.f32 %v399, 12.5
    %v1024 = vmul.f32 %v409, 12.5
    %v1025 = vmul.f32 %v419, 12.5
    %v1026 = vmul.f32 %v429, 12.5
    %v1027 = vmul.f32 %v439, 12.5
    %v1028 = vmul.f32 %v449, 12.5
    %v1029 = vmul.f32 %v459, 12.5
    %v1030 = vmul.f32 %v469, 12.5
    %v1031 = vmul.f32 %v479, 12.5
    %v1032 = vmul.f32 %v489, 12.5
    %v1033 = vmul.f32 %v499, 12.5
    %v1034 = vmul.f32 %v509, 12.5
    %v1035 = vmul.f32 %v519, 12.5
    %v1036 = vmul.f32 %v529, 12.5
    %v1037 = vmul.f32 %v539, 12.5
    %v1038 = vmul.f32 %v549, 12.5
    %v1039 = vmul.f32 %v559, 12.5
    %v1040 = vmul.f32 %v48, %v1008
    %v1041 = vmul.f32 %v49, %v1009
    %v1042 = vmul.f32 %v50, %v1010
    %v1043 = vmul.f32 %v51, %v1011
    %v1044 = vmul.f32 %v52, %v1012
    %v1045 = vmul.f32 %v53, %v1013
    %v1046 = vmul.f32 %v54, %v1014
    %v1047 = vmul.f32 %v55, %v1015
    %v1048 = vmul.f32 %v56, %v1016
    %v1049 = vmul.f32 %v57, %v1017
    %v1050 = vmul.f32 %v58, %v1018
    %v1051 = vmul.f32 %v59, %v1019
    %v1052 = vmul.f32 %v60, %v1020
    %v1053 = vmul.f32 %v61, %v1021
    %v1054 = vmul.f32 %v62, %v1022
    %v1055 = vmul.f32 %v63, %v1023
    %v1056 = vmul.f32 %v64, %v1024
    %v1057 = vmul.f32 %v65, %v1025
    %v1058 = vmul.f32 %v66, %v1026
    %v1059 = vmul.f32 %v67, %v1027
    %v1060 = vmul.f32 %v68, %v1028
    %v1061 = vmul.f32 %v69, %v1029
    %v1062 = vmul.f32 %v70, %v1030
    %v1063 = vmul.f32 %v71, %v1031
    %v1064 = vmul.f32 %v72, %v1032
    %v1065 = vmul.f32 %v73, %v1033
    %v1066 = vmul.f32 %v74, %v1034
    %v1067 = vmul.f32 %v75, %v1035
    %v1068 = vmul.f32 %v76, %v1036
    %v1069 = vmul.f32 %v77, %v1037
    %v1070 = vmul.f32 %v78, %v1038
    %v1071 = vmul.f32 %v79, %v1039
    %v1072 = vpack.c.bf16 %v1040, %v1040
    %v1073 = vpack.c.bf16 %v1041, %v1041
    %v1074 = vpack.c.bf16 %v1042, %v1042
    %v1075 = vpack.c.bf16 %v1043, %v1043
    %v1076 = vpack.c.bf16 %v1044, %v1044
    %v1077 = vpack.c.bf16 %v1045, %v1045
    %v1078 = vpack.c.bf16 %v1046, %v1046
    %v1079 = vpack.c.bf16 %v1047, %v1047
    %v1080 = vpack.c.bf16 %v1048, %v1048
    %v1081 = vpack.c.bf16 %v1049, %v1049
    %v1082 = vpack.c.bf16 %v1050, %v1050
    %v1083 = vpack.c.bf16 %v1051, %v1051
    %v1084 = vpack.c.bf16 %v1052, %v1052
    %v1085 = vpack.c.bf16 %v1053, %v1053
    %v1086 = vpack.c.bf16 %v1054, %v1054
    %v1087 = vpack.c.bf16 %v1055, %v1055
    %v1088 = vpack.c.bf16 %v1056, %v1056
    %v1089 = vpack.c.bf16 %v1057, %v1057
    %v1090 = vpack.c.bf16 %v1058, %v1058
    %v1091 = vpack.c.bf16 %v1059, %v1059
    %v1092 = vpack.c.bf16 %v1060, %v1060
    %v1093 = vpack.c.bf16 %v1061, %v1061
    %v1094 = vpack.c.bf16 %v1062, %v1062
    %v1095 = vpack.c.bf16 %v1063, %v1063
    %v1096 = vpack.c.bf16 %v1064, %v1064
    %v1097 = vpack.c.bf16 %v1065, %v1065
    %v1098 = vpack.c.bf16 %v1066, %v1066
    %v1099 = vpack.c.bf16 %v1067, %v1067
    %v1100 = vpack.c.bf16 %v1068, %v1068
    %v1101 = vpack.c.bf16 %v1069, %v1069
    %v1102 = vpack.c.bf16 %v1070, %v1070
    %v1103 = vpack.c.bf16 %v1071, %v1071
    %v1104 = vmul.f32 %v80, %v697
    %v1105 = vmul.f32 %v81, %v707
    %v1106 = vmul.f32 %v82, %v717
    %v1107 = vmul.f32 %v83, %v727
    %v1108 = vmul.f32 %v84, %v737
    %v1109 = vmul.f32 %v85, %v747
    %v1110 = vmul.f32 %v86, %v757
    %v1111 = vmul.f32 %v87, %v767
    %v1112 = vmul.f32 %v88, %v777
    %v1113 = vmul.f32 %v89, %v787
    %v1114 = vmul.f32 %v90, %v797
    %v1115 = vmul.f32 %v91, %v807
    %v1116 = vmul.f32 %v92, %v817
    %v1117 = vmul.f32 %v93, %v827
    %v1118 = vmul.f32 %v94, %v837
    %v1119 = vmul.f32 %v95, %v847
    %v1120 = vmul.f32 %v96, %v857
    %v1121 = vmul.f32 %v97, %v867
    %v1122 = vmul.f32 %v98, %v877
    %v1123 = vmul.f32 %v99, %v887
    %v1124 = vmul.f32 %v100, %v897
    %v1125 = vmul.f32 %v101, %v907
    %v1126 = vmul.f32 %v102, %v917
    %v1127 = vmul.f32 %v103, %v927
    %v1128 = vmul.f32 %v104, %v937
    %v1129 = vmul.f32 %v105, %v947
    %v1130 = vmul.f32 %v106, %v957
    %v1131 = vmul.f32 %v107, %v967
    %v1132 = vmul.f32 %v108, %v977
    %v1133 = vmul.f32 %v109, %v987
    %v1134 = vmul.f32 %v110, %v997
    %v1135 = vmul.f32 %v111, %v1007
    %v1136 = vpack.c.bf16 %v1104, %v1104
    %v1137 = vpack.c.bf16 %v1105, %v1105
    %v1138 = vpack.c.bf16 %v1106, %v1106
    %v1139 = vpack.c.bf16 %v1107, %v1107
    %v1140 = vpack.c.bf16 %v1108, %v1108
    %v1141 = vpack.c.bf16 %v1109, %v1109
    %v1142 = vpack.c.bf16 %v1110, %v1110
    %v1143 = vpack.c.bf16 %v1111, %v1111
    %v1144 = vpack.c.bf16 %v1112, %v1112
    %v1145 = vpack.c.bf16 %v1113, %v1113
    %v1146 = vpack.c.bf16 %v1114, %v1114
    %v1147 = vpack.c.bf16 %v1115, %v1115
    %v1148 = vpack.c.bf16 %v1116, %v1116
    %v1149 = vpack.c.bf16 %v1117, %v1117
    %v1150 = vpack.c.bf16 %v1118, %v1118
    %v1151 = vpack.c.bf16 %v1119, %v1119
    %v1152 = vpack.c.bf16 %v1120, %v1120
    %v1153 = vpack.c.bf16 %v1121, %v1121
    %v1154 = vpack.c.bf16 %v1122, %v1122
    %v1155 = vpack.c.bf16 %v1123, %v1123
    %v1156 = vpack.c.bf16 %v1124, %v1124
    %v1157 = vpack.c.bf16 %v1125, %v1125
    %v1158 = vpack.c.bf16 %v1126, %v1126
    %v1159 = vpack.c.bf16 %v1127, %v1127
    %v1160 = vpack.c.bf16 %v1128, %v1128
    %v1161 = vpack.c.bf16 %v1129, %v1129
    %v1162 = vpack.c.bf16 %v1130, %v1130
    %v1163 = vpack.c.bf16 %v1131, %v1131
    %v1164 = vpack.c.bf16 %v1132, %v1132
    %v1165 = vpack.c.bf16 %v1133, %v1133
    %v1166 = vpack.c.bf16 %v1134, %v1134
    %v1167 = vpack.c.bf16 %v1135, %v1135
    %1168 = vst [vmem:[#allocation7] sm:$0xf] %v1072
    %1169 = vst [vmem:[#allocation7 + $0x4] sm:$0xf] %v1073
    %1170 = vst [vmem:[#allocation7 + $0x8] sm:$0xf] %v1074
    %1171 = vst [vmem:[#allocation7 + $0xc] sm:$0xf] %v1075
    %1172 = vst [vmem:[#allocation7 + $0x10] sm:$0xf] %v1076
    %1173 = vst [vmem:[#allocation7 + $0x14] sm:$0xf] %v1077
    %1174 = vst [vmem:[#allocation7 + $0x18] sm:$0xf] %v1078
    %1175 = vst [vmem:[#allocation7 + $0x1c] sm:$0xf] %v1079
    %1176 = vst [vmem:[#allocation7 + $0x20] sm:$0xf] %v1080
    %1177 = vst [vmem:[#allocation7 + $0x24] sm:$0xf] %v1081
    %1178 = vst [vmem:[#allocation7 + $0x28] sm:$0xf] %v1082
    %1179 = vst [vmem:[#allocation7 + $0x2c] sm:$0xf] %v1083
    %1180 = vst [vmem:[#allocation7 + $0x30] sm:$0xf] %v1084
    %1181 = vst [vmem:[#allocation7 + $0x34] sm:$0xf] %v1085
    %1182 = vst [vmem:[#allocation7 + $0x38] sm:$0xf] %v1086
    %1183 = vst [vmem:[#allocation7 + $0x3c] sm:$0xf] %v1087
    %1184 = vst [vmem:[#allocation7 + $0x40] sm:$0xf] %v1088
    %1185 = vst [vmem:[#allocation7 + $0x44] sm:$0xf] %v1089
    %1186 = vst [vmem:[#allocation7 + $0x48] sm:$0xf] %v1090
    %1187 = vst [vmem:[#allocation7 + $0x4c] sm:$0xf] %v1091
    %1188 = vst [vmem:[#allocation7 + $0x50] sm:$0xf] %v1092
    %1189 = vst [vmem:[#allocation7 + $0x54] sm:$0xf] %v1093
    %1190 = vst [vmem:[#allocation7 + $0x58] sm:$0xf] %v1094
    %1191 = vst [vmem:[#allocation7 + $0x5c] sm:$0xf] %v1095
    %1192 = vst [vmem:[#allocation7 + $0x60] sm:$0xf] %v1096
    %1193 = vst [vmem:[#allocation7 + $0x64] sm:$0xf] %v1097
    %1194 = vst [vmem:[#allocation7 + $0x68] sm:$0xf] %v1098
    %1195 = vst [vmem:[#allocation7 + $0x6c] sm:$0xf] %v1099
    %1196 = vst [vmem:[#allocation7 + $0x70] sm:$0xf] %v1100
    %1197 = vst [vmem:[#allocation7 + $0x74] sm:$0xf] %v1101
    %1198 = vst [vmem:[#allocation7 + $0x78] sm:$0xf] %v1102
    %1199 = vst [vmem:[#allocation7 + $0x7c] sm:$0xf] %v1103
    %1200 = vst [vmem:[#allocation8] sm:$0xf] %v1136
    %1201 = vst [vmem:[#allocation8 + $0x4] sm:$0xf] %v1137
    %1202 = vst [vmem:[#allocation8 + $0x8] sm:$0xf] %v1138
    %1203 = vst [vmem:[#allocation8 + $0xc] sm:$0xf] %v1139
    %1204 = vst [vmem:[#allocation8 + $0x10] sm:$0xf] %v1140
    %1205 = vst [vmem:[#allocation8 + $0x14] sm:$0xf] %v1141
    %1206 = vst [vmem:[#allocation8 + $0x18] sm:$0xf] %v1142
    %1207 = vst [vmem:[#allocation8 + $0x1c] sm:$0xf] %v1143
    %1208 = vst [vmem:[#allocation8 + $0x20] sm:$0xf] %v1144
    %1209 = vst [vmem:[#allocation8 + $0x24] sm:$0xf] %v1145
    %1210 = vst [vmem:[#allocation8 + $0x28] sm:$0xf] %v1146
    %1211 = vst [vmem:[#allocation8 + $0x2c] sm:$0xf] %v1147
    %1212 = vst [vmem:[#allocation8 + $0x30] sm:$0xf] %v1148
    %1213 = vst [vmem:[#allocation8 + $0x34] sm:$0xf] %v1149
    %1214 = vst [vmem:[#allocation8 + $0x38] sm:$0xf] %v1150
    %1215 = vst [vmem:[#allocation8 + $0x3c] sm:$0xf] %v1151
    %1216 = vst [vmem:[#allocation8 + $0x40] sm:$0xf] %v1152
    %1217 = vst [vmem:[#allocation8 + $0x44] sm:$0xf] %v1153
    %1218 = vst [vmem:[#allocation8 + $0x48] sm:$0xf] %v1154
    %1219 = vst [vmem:[#allocation8 + $0x4c] sm:$0xf] %v1155
    %1220 = vst [vmem:[#allocation8 + $0x50] sm:$0xf] %v1156
    %1221 = vst [vmem:[#allocation8 + $0x54] sm:$0xf] %v1157
    %1222 = vst [vmem:[#allocation8 + $0x58] sm:$0xf] %v1158
    %1223 = vst [vmem:[#allocation8 + $0x5c] sm:$0xf] %v1159
    %1224 = vst [vmem:[#allocation8 + $0x60] sm:$0xf] %v1160
    %1225 = vst [vmem:[#allocation8 + $0x64] sm:$0xf] %v1161
    %1226 = vst [vmem:[#allocation8 + $0x68] sm:$0xf] %v1162
    %1227 = vst [vmem:[#allocation8 + $0x6c] sm:$0xf] %v1163
    %1228 = vst [vmem:[#allocation8 + $0x70] sm:$0xf] %v1164
    %1229 = vst [vmem:[#allocation8 + $0x74] sm:$0xf] %v1165
    %1230 = vst [vmem:[#allocation8 + $0x78] sm:$0xf] %v1166
    %1231 = vst [vmem:[#allocation8 + $0x7c] sm:$0xf] %v1167
    %v1232 = vunpack.c.l.bf16 %v1072
    %v1233 = vunpack.c.l.bf16 %v1073
    %v1234 = vunpack.c.l.bf16 %v1074
    %v1235 = vunpack.c.l.bf16 %v1075
    %v1236 = vunpack.c.l.bf16 %v1076
    %v1237 = vunpack.c.l.bf16 %v1077
    %v1238 = vunpack.c.l.bf16 %v1078
    %v1239 = vunpack.c.l.bf16 %v1079
    %v1240 = vunpack.c.l.bf16 %v1080
    %v1241 = vunpack.c.l.bf16 %v1081
    %v1242 = vunpack.c.l.bf16 %v1082
    %v1243 = vunpack.c.l.bf16 %v1083
    %v1244 = vunpack.c.l.bf16 %v1084
    %v1245 = vunpack.c.l.bf16 %v1085
    %v1246 = vunpack.c.l.bf16 %v1086
    %v1247 = vunpack.c.l.bf16 %v1087
    %v1248 = vunpack.c.l.bf16 %v1088
    %v1249 = vunpack.c.l.bf16 %v1089
    %v1250 = vunpack.c.l.bf16 %v1090
    %v1251 = vunpack.c.l.bf16 %v1091
    %v1252 = vunpack.c.l.bf16 %v1092
    %v1253 = vunpack.c.l.bf16 %v1093
    %v1254 = vunpack.c.l.bf16 %v1094
    %v1255 = vunpack.c.l.bf16 %v1095
    %v1256 = vunpack.c.l.bf16 %v1096
    %v1257 = vunpack.c.l.bf16 %v1097
    %v1258 = vunpack.c.l.bf16 %v1098
    %v1259 = vunpack.c.l.bf16 %v1099
    %v1260 = vunpack.c.l.bf16 %v1100
    %v1261 = vunpack.c.l.bf16 %v1101
    %v1262 = vunpack.c.l.bf16 %v1102
    %v1263 = vunpack.c.l.bf16 %v1103
    %v1264 = vunpack.c.l.bf16 %v1136
    %v1265 = vunpack.c.l.bf16 %v1137
    %v1266 = vunpack.c.l.bf16 %v1138
    %v1267 = vunpack.c.l.bf16 %v1139
    %v1268 = vunpack.c.l.bf16 %v1140
    %v1269 = vunpack.c.l.bf16 %v1141
    %v1270 = vunpack.c.l.bf16 %v1142
    %v1271 = vunpack.c.l.bf16 %v1143
    %v1272 = vunpack.c.l.bf16 %v1144
    %v1273 = vunpack.c.l.bf16 %v1145
    %v1274 = vunpack.c.l.bf16 %v1146
    %v1275 = vunpack.c.l.bf16 %v1147
    %v1276 = vunpack.c.l.bf16 %v1148
    %v1277 = vunpack.c.l.bf16 %v1149
    %v1278 = vunpack.c.l.bf16 %v1150
    %v1279 = vunpack.c.l.bf16 %v1151
    %v1280 = vunpack.c.l.bf16 %v1152
    %v1281 = vunpack.c.l.bf16 %v1153
    %v1282 = vunpack.c.l.bf16 %v1154
    %v1283 = vunpack.c.l.bf16 %v1155
    %v1284 = vunpack.c.l.bf16 %v1156
    %v1285 = vunpack.c.l.bf16 %v1157
    %v1286 = vunpack.c.l.bf16 %v1158
    %v1287 = vunpack.c.l.bf16 %v1159
    %v1288 = vunpack.c.l.bf16 %v1160
    %v1289 = vunpack.c.l.bf16 %v1161
    %v1290 = vunpack.c.l.bf16 %v1162
    %v1291 = vunpack.c.l.bf16 %v1163
    %v1292 = vunpack.c.l.bf16 %v1164
    %v1293 = vunpack.c.l.bf16 %v1165
    %v1294 = vunpack.c.l.bf16 %v1166
    %v1295 = vunpack.c.l.bf16 %v1167
    %v1296 = vmul.f32 %v1232, %v1264
    %v1297 = vmul.f32 %v1233, %v1265
    %v1298 = vmul.f32 %v1234, %v1266
    %v1299 = vmul.f32 %v1235, %v1267
    %v1300 = vmul.f32 %v1236, %v1268
    %v1301 = vmul.f32 %v1237, %v1269
    %v1302 = vmul.f32 %v1238, %v1270
    %v1303 = vmul.f32 %v1239, %v1271
    %v1304 = vmul.f32 %v1240, %v1272
    %v1305 = vmul.f32 %v1241, %v1273
    %v1306 = vmul.f32 %v1242, %v1274
    %v1307 = vmul.f32 %v1243, %v1275
    %v1308 = vmul.f32 %v1244, %v1276
    %v1309 = vmul.f32 %v1245, %v1277
    %v1310 = vmul.f32 %v1246, %v1278
    %v1311 = vmul.f32 %v1247, %v1279
    %v1312 = vmul.f32 %v1248, %v1280
    %v1313 = vmul.f32 %v1249, %v1281
    %v1314 = vmul.f32 %v1250, %v1282
    %v1315 = vmul.f32 %v1251, %v1283
    %v1316 = vmul.f32 %v1252, %v1284
    %v1317 = vmul.f32 %v1253, %v1285
    %v1318 = vmul.f32 %v1254, %v1286
    %v1319 = vmul.f32 %v1255, %v1287
    %v1320 = vmul.f32 %v1256, %v1288
    %v1321 = vmul.f32 %v1257, %v1289
    %v1322 = vmul.f32 %v1258, %v1290
    %v1323 = vmul.f32 %v1259, %v1291
    %v1324 = vmul.f32 %v1260, %v1292
    %v1325 = vmul.f32 %v1261, %v1293
    %v1326 = vmul.f32 %v1262, %v1294
    %v1327 = vmul.f32 %v1263, %v1295
    %1328 = vadd.xlane.f32.xlu0 %v1296
    %v1329 = vpop.xlane.xlu0 %1328
    %1330 = vadd.xlane.f32.xlu0 %v1297
    %v1331 = vpop.xlane.xlu0 %1330
    %1332 = vadd.xlane.f32.xlu0 %v1298
    %v1333 = vpop.xlane.xlu0 %1332
    %1334 = vadd.xlane.f32.xlu0 %v1299
    %v1335 = vpop.xlane.xlu0 %1334
    %1336 = vadd.xlane.f32.xlu0 %v1300
    %v1337 = vpop.xlane.xlu0 %1336
    %1338 = vadd.xlane.f32.xlu0 %v1301
    %v1339 = vpop.xlane.xlu0 %1338
    %1340 = vadd.xlane.f32.xlu0 %v1302
    %v1341 = vpop.xlane.xlu0 %1340
    %1342 = vadd.xlane.f32.xlu0 %v1303
    %v1343 = vpop.xlane.xlu0 %1342
    %1344 = vadd.xlane.f32.xlu0 %v1304
    %v1345 = vpop.xlane.xlu0 %1344
    %1346 = vadd.xlane.f32.xlu0 %v1305
    %v1347 = vpop.xlane.xlu0 %1346
    %1348 = vadd.xlane.f32.xlu0 %v1306
    %v1349 = vpop.xlane.xlu0 %1348
    %1350 = vadd.xlane.f32.xlu0 %v1307
    %v1351 = vpop.xlane.xlu0 %1350
    %1352 = vadd.xlane.f32.xlu0 %v1308
    %v1353 = vpop.xlane.xlu0 %1352
    %1354 = vadd.xlane.f32.xlu0 %v1309
    %v1355 = vpop.xlane.xlu0 %1354
    %1356 = vadd.xlane.f32.xlu0 %v1310
    %v1357 = vpop.xlane.xlu0 %1356
    %1358 = vadd.xlane.f32.xlu0 %v1311
    %v1359 = vpop.xlane.xlu0 %1358
    %1360 = vadd.xlane.f32.xlu0 %v1312
    %v1361 = vpop.xlane.xlu0 %1360
    %1362 = vadd.xlane.f32.xlu0 %v1313
    %v1363 = vpop.xlane.xlu0 %1362
    %1364 = vadd.xlane.f32.xlu0 %v1314
    %v1365 = vpop.xlane.xlu0 %1364
    %1366 = vadd.xlane.f32.xlu0 %v1315
    %v1367 = vpop.xlane.xlu0 %1366
    %1368 = vadd.xlane.f32.xlu0 %v1316
    %v1369 = vpop.xlane.xlu0 %1368
    %1370 = vadd.xlane.f32.xlu0 %v1317
    %v1371 = vpop.xlane.xlu0 %1370
    %1372 = vadd.xlane.f32.xlu0 %v1318
    %v1373 = vpop.xlane.xlu0 %1372
    %1374 = vadd.xlane.f32.xlu0 %v1319
    %v1375 = vpop.xlane.xlu0 %1374
    %1376 = vadd.xlane.f32.xlu0 %v1320
    %v1377 = vpop.xlane.xlu0 %1376
    %1378 = vadd.xlane.f32.xlu0 %v1321
    %v1379 = vpop.xlane.xlu0 %1378
    %1380 = vadd.xlane.f32.xlu0 %v1322
    %v1381 = vpop.xlane.xlu0 %1380
    %1382 = vadd.xlane.f32.xlu0 %v1323
    %v1383 = vpop.xlane.xlu0 %1382
    %1384 = vadd.xlane.f32.xlu0 %v1324
    %v1385 = vpop.xlane.xlu0 %1384
    %1386 = vadd.xlane.f32.xlu0 %v1325
    %v1387 = vpop.xlane.xlu0 %1386
    %1388 = vadd.xlane.f32.xlu0 %v1326
    %v1389 = vpop.xlane.xlu0 %1388
    %1390 = vadd.xlane.f32.xlu0 %v1327
    %v1391 = vpop.xlane.xlu0 %1390
    %1392 = vst [vmem:[#allocation10] sm:$0xff] %v1329
    %1393 = vst [vmem:[#allocation10 + $0x8] sm:$0xff] %v1331
    %1394 = vst [vmem:[#allocation10 + $0x10] sm:$0xff] %v1333
    %1395 = vst [vmem:[#allocation10 + $0x18] sm:$0xff] %v1335
    %1396 = vst [vmem:[#allocation10 + $0x20] sm:$0xff] %v1337
    %1397 = vst [vmem:[#allocation10 + $0x28] sm:$0xff] %v1339
    %1398 = vst [vmem:[#allocation10 + $0x30] sm:$0xff] %v1341
    %1399 = vst [vmem:[#allocation10 + $0x38] sm:$0xff] %v1343
    %1400 = vst [vmem:[#allocation10 + $0x40] sm:$0xff] %v1345
    %1401 = vst [vmem:[#allocation10 + $0x48] sm:$0xff] %v1347
    %1402 = vst [vmem:[#allocation10 + $0x50] sm:$0xff] %v1349
    %1403 = vst [vmem:[#allocation10 + $0x58] sm:$0xff] %v1351
    %1404 = vst [vmem:[#allocation10 + $0x60] sm:$0xff] %v1353
    %1405 = vst [vmem:[#allocation10 + $0x68] sm:$0xff] %v1355
    %1406 = vst [vmem:[#allocation10 + $0x70] sm:$0xff] %v1357
    %1407 = vst [vmem:[#allocation10 + $0x78] sm:$0xff] %v1359
    %1408 = vst [vmem:[#allocation10 + $0x80] sm:$0xff] %v1361
    %1409 = vst [vmem:[#allocation10 + $0x88] sm:$0xff] %v1363
    %1410 = vst [vmem:[#allocation10 + $0x90] sm:$0xff] %v1365
    %1411 = vst [vmem:[#allocation10 + $0x98] sm:$0xff] %v1367
    %1412 = vst [vmem:[#allocation10 + $0xa0] sm:$0xff] %v1369
    %1413 = vst [vmem:[#allocation10 + $0xa8] sm:$0xff] %v1371
    %1414 = vst [vmem:[#allocation10 + $0xb0] sm:$0xff] %v1373
    %1415 = vst [vmem:[#allocation10 + $0xb8] sm:$0xff] %v1375
    %1416 = vst [vmem:[#allocation10 + $0xc0] sm:$0xff] %v1377
    %1417 = vst [vmem:[#allocation10 + $0xc8] sm:$0xff] %v1379
    %1418 = vst [vmem:[#allocation10 + $0xd0] sm:$0xff] %v1381
    %1419 = vst [vmem:[#allocation10 + $0xd8] sm:$0xff] %v1383
    %1420 = vst [vmem:[#allocation10 + $0xe0] sm:$0xff] %v1385
    %1421 = vst [vmem:[#allocation10 + $0xe8] sm:$0xff] %v1387
    %1422 = vst [vmem:[#allocation10 + $0xf0] sm:$0xff] %v1389
    %1423 = vst [vmem:[#allocation10 + $0xf8] sm:$0xff] %v1391
    // Predicated region
    $region18: #{tpu_custom_call.1} parent=1 // pred_check
      _
    $region19: #{tpu_custom_call.1} parent=1 // pred_check_branch
      %1425 = sbr.rel (0) target = $region21
    $region20: #{tpu_custom_call.1} parent=1 // pred_region
      %1427 = vsyncadd [#allocation4], 0
      %s1428 = sshll.u32 [#allocation7], 4
      %s1429 = int_to_ptr.vmem [resolvable:$true] %s1428
      %s1430 = sshll.u32 %s2, 4
      %s1431 = int_to_ptr.hbm [resolvable:$true] %s1430
      %1436 = dma.vmem_to_hbm [thread:$0]  %s1429, 2048, %s1431, [#allocation4], 64, 64, 4
    $region21: #{tpu_custom_call.1} parent=1 // pred_fallthru
      _
    // Predicated region
    $region22: #{tpu_custom_call.1} parent=1 // pred_check
      _
    $region23: #{tpu_custom_call.1} parent=1 // pred_check_branch
      %1438 = sbr.rel (0) target = $region25
    $region24: #{tpu_custom_call.1} parent=1 // pred_region
      %1440 = vsyncadd [#allocation9], 0
      %s1441 = sshll.u32 [#allocation8], 4
      %s1442 = int_to_ptr.vmem [resolvable:$true] %s1441
      %s1443 = sshll.u32 %s3, 4
      %s1444 = int_to_ptr.hbm [resolvable:$true] %s1443
      %1449 = dma.vmem_to_hbm [thread:$0]  %s1442, 2048, %s1444, [#allocation9], 64, 64, 4
    $region25: #{tpu_custom_call.1} parent=1 // pred_fallthru
      _
    // Predicated region
    $region26: #{tpu_custom_call.1} parent=1 // pred_check
      _
    $region27: #{tpu_custom_call.1} parent=1 // pred_check_branch
      %1451 = sbr.rel (0) target = $region29
    $region28: #{tpu_custom_call.1} parent=1 // pred_region
      %1453 = vsyncadd [#allocation9], 0
      %s1454 = sshll.u32 [#allocation10], 4
      %s1455 = int_to_ptr.vmem [resolvable:$true] %s1454
      %s1456 = sshll.u32 %s4, 4
      %s1457 = int_to_ptr.hbm [resolvable:$true] %s1456
      %1462 = dma.vmem_to_hbm [thread:$0]  %s1455, 4096, %s1457, [#allocation9], 128, 128, 8
    $region29: #{tpu_custom_call.1} parent=1 // pred_fallthru
      _
    // Predicated region
    $region30: #{tpu_custom_call.1} parent=1 // pred_check
      _
    $region31: #{tpu_custom_call.1} parent=1 // pred_check_branch
      %1464 = sbr.rel (0) target = $region33
    $region32: #{tpu_custom_call.1} parent=1 // pred_region
      %1466 = dma.done [#allocation4], 2048
    $region33: #{tpu_custom_call.1} parent=1 // pred_fallthru
      _
    // Predicated region
    $region34: #{tpu_custom_call.1} parent=1 // pred_check
      _
    $region35: #{tpu_custom_call.1} parent=1 // pred_check_branch
      %1468 = sbr.rel (0) target = $region37
    $region36: #{tpu_custom_call.1} parent=1 // pred_region
      %1470 = dma.done [#allocation9], 2048
    $region37: #{tpu_custom_call.1} parent=1 // pred_fallthru
      _
    // Predicated region
    $region38: #{tpu_custom_call.1} parent=1 // pred_check
      _
    $region39: #{tpu_custom_call.1} parent=1 // pred_check_branch
      %1472 = sbr.rel (0) target = $region41
    $region40: #{tpu_custom_call.1} parent=1 // pred_region
      %1474 = dma.done [#allocation9], 4096
    $region41: #{tpu_custom_call.1} parent=1 // pred_fallthru
      _
    %1475 = vsyncpa [#allocation3], 1
    %1476 = vsyncpa [#allocation6], 1
    %1477 = vsyncpa [#allocation4], 1
    %1478 = vsyncpa [#allocation9], 1

</llo_original>
